<compile_context>
chip_gen: v5e
topology: v5e:2x2
jax: 0.10.0
libtpu: 0.0.40
codegen_flags: <defaults>
</compile_context>

<pallas_src>
import jax
import jax.numpy as jnp
from jax import lax
from jax.experimental import pallas as pl
from jax.experimental.pallas import tpu as pltpu
import numpy as np

BN_EPS = 1e-5
DOT_DTYPE = jnp.bfloat16   # MXU-native on v5e/v6e/v7x; accumulation stays f32.

# conv hyper-parameters fixed by the PyTorch module
_K = 3
_P1, _D1 = 2, 2            # conv1: 3x3, dilation 2, padding 2
_P2, _D2 = 1, 1            # conv2: 3x3, dilation 1, padding 1


def _round_up(x, m):
    return (x + m - 1) // m * m


# ------------------------- weight preprocessing ----------------------------- #

def _banded_conv_weights(w_hwio, w, pad, dilation, dtype):
    """Fold the kw taps AND the zero W-padding of a KxK conv into per-kh matmul
    weights T[kh] of shape (W*Cin, W*Cout):
        T[kh, xw*Cin + ci, wo*Cout + co] = w[kh, kw, ci, co]
    with xw = wo + kw*dilation - pad; taps whose xw falls outside [0, W) are
    dropped (that IS the zero W-padding).  Done once per forward here (in a
    real model: once at weight-load time)."""
    K, _, Cin, Cout = w_hwio.shape
    xw = jnp.arange(w)
    wo = jnp.arange(w)
    kw = jnp.arange(K)
    tgt = wo[None, None, :] + dilation * kw[:, None, None] - pad        # (K,1,W)
    mask = (xw[None, :, None] == tgt).astype(w_hwio.dtype)              # (K,W,W)
    t = jnp.einsum('kxw,hkio->hxiwo', mask, w_hwio)      # (K, W, Cin, W, Cout)
    return t.reshape(K, w * Cin, w * Cout).astype(dtype)


# ------------------------------ fused kernel -------------------------------- #

def _make_block_kernel(N, H, W, Cin, Cout, rows1, rows2):
    NH = N * H
    WCI, WCO = W * Cin, W * Cout
    top1, bot1 = _P1 * N, (_P1 + H) * N          # conv1 halo row boundaries
    top2, bot2 = _P2 * N, (_P2 + H) * N          # conv2 halo row boundaries

    def kernel(x_ref, t1_ref, t2_ref, tsc_ref, gt_ref, g_ref, bb_ref,
               o_ref, pad1_ref, pad2_ref):
        f32 = jnp.float32
        gt = gt_ref[...]                          # (Cout, W*Cout) replication

        def bcast_c(v):                           # (1, Cout) -> (1, W*Cout)
            return jnp.dot(v, gt, preferred_element_type=f32)

        def reduce_c(v):                          # (1, W*Cout) -> (1, Cout)
            return lax.dot_general(v, gt, (((1,), (1,)), ((), ())),
                                   preferred_element_type=f32)

        def bn(act, gamma, beta_row, relu):
            # training-mode BatchNorm2d over (N, H, W): two-pass batch stats,
            # computed entirely in-kernel on the VMEM-resident activation.
            cnt = float(NH * W)
            mean_c = reduce_c(jnp.sum(act, axis=0, keepdims=True)) / cnt
            d = act - bcast_c(mean_c)
            var_c = reduce_c(jnp.sum(d * d, axis=0, keepdims=True)) / cnt
            scale_c = gamma * lax.rsqrt(var_c + BN_EPS)
            y = d * bcast_c(scale_c) + beta_row   # beta_row precomputed host-side
            return jnp.maximum(y, 0.0) if relu else y

        def conv3x3(pad_ref, t_ref, dil):
            # Rows are h-major / n-minor, so each kh tap is one contiguous
            # (N*H)-row slice and ONE MXU matmul for the whole batch; the kw
            # taps and W-padding live inside the banded weight t_ref[kh].
            acc = jnp.zeros((NH, WCO), f32)
            for kh in range(_K):
                s = kh * dil * N
                acc = acc + jnp.dot(pad_ref[s:s + NH, :], t_ref[kh],
                                    preferred_element_type=f32)
            return acc

        x = x_ref[...]                            # (N*H, W*Cin) bf16

        # ---- conv1 input: zero halo rows only, then write interior ----------
        if top1 > 0:
            pad1_ref[0:top1, :] = jnp.zeros((top1, WCI), pad1_ref.dtype)
        if rows1 > bot1:
            pad1_ref[bot1:rows1, :] = jnp.zeros((rows1 - bot1, WCI), pad1_ref.dtype)
        pad1_ref[top1:bot1, :] = x

        # ---- conv1 (3x3, dilation 2) -> BN(batch stats) -> ReLU --------------
        # (conv bias dropped: exactly cancelled by the batch-mean subtraction)
        act1 = bn(conv3x3(pad1_ref, t1_ref, _D1),
                  g_ref[0:1, :], bb_ref[0:1, :], relu=True)

        # ---- conv2 input: zero halos, write interior (single f32->bf16 cast) -
        if top2 > 0:
            pad2_ref[0:top2, :] = jnp.zeros((top2, WCO), pad2_ref.dtype)
        if rows2 > bot2:
            pad2_ref[bot2:rows2, :] = jnp.zeros((rows2 - bot2, WCO), pad2_ref.dtype)
        pad2_ref[top2:bot2, :] = act1.astype(pad2_ref.dtype)

        # ---- conv2 (3x3, dilation 1) -> BN ------------------------------------
        main = bn(conv3x3(pad2_ref, t2_ref, _D2),
                  g_ref[1:2, :], bb_ref[1:2, :], relu=False)

        # ---- 1x1 shortcut: one matmul for the whole batch -> BN ---------------
        sc = jnp.dot(x, tsc_ref[...], preferred_element_type=f32)
        short = bn(sc, g_ref[2:3, :], bb_ref[2:3, :], relu=False)

        # ---- residual add + ReLU: single lane-dense (W*Cout = 128) store ------
        o_ref[...] = jnp.maximum(main + short, 0.0).astype(o_ref.dtype)

    return kernel


# --------------------------------- wrapper ---------------------------------- #

def resnet_forward(x_nchw, p):
    N, Cin, H, W = x_nchw.shape
    Cout = p["w1"].shape[-1]
    HP1, HP2 = H + 2 * _P1, H + 2 * _P2
    rows1 = _round_up(HP1 * N, 8)           # sublane-aligned scratch row counts
    rows2 = _round_up(HP2 * N, 8)

    # NCHW -> h-major/n-minor, lane-dense (H*N, W*Cin) layout, bf16 once.
    x_fused = jnp.transpose(x_nchw, (2, 0, 3, 1)).reshape(H * N, W * Cin)
    x_fused = x_fused.astype(DOT_DTYPE)

    t1 = _banded_conv_weights(p["w1"], W, _P1, _D1, DOT_DTYPE)    # (3, W*Cin,  W*Cout)
    t2 = _banded_conv_weights(p["w2"], W, _P2, _D2, DOT_DTYPE)    # (3, W*Cout, W*Cout)
    tsc = _banded_conv_weights(p["wsc"], W, 0, 1, DOT_DTYPE)[0]   # (W*Cin, W*Cout)

    gt = jnp.tile(jnp.eye(Cout, dtype=jnp.float32), (1, W))       # (Cout, W*Cout)
    gammas = jnp.stack([p["g1"], p["g2"], p["gsc"]]).astype(jnp.float32)   # (3, Cout)
    # Static beta broadcasts precomputed host-side, lane layout (w, c):
    betas_b = jnp.tile(
        jnp.stack([p["be1"], p["be2"], p["besc"]]).astype(jnp.float32), (1, W))

    kernel = _make_block_kernel(N, H, W, Cin, Cout, rows1, rows2)
    out = pl.pallas_call(
        kernel,
        out_shape=jax.ShapeDtypeStruct((H * N, W * Cout), jnp.float32),
        in_specs=[pl.BlockSpec(memory_space=pltpu.MemorySpace.VMEM)] * 7,
        out_specs=pl.BlockSpec(memory_space=pltpu.MemorySpace.VMEM),
        scratch_shapes=[
            pltpu.VMEM((rows1, W * Cin), DOT_DTYPE),    # padded conv1 input
            pltpu.VMEM((rows2, W * Cout), DOT_DTYPE),   # padded conv2 input
        ],
        compiler_params=pltpu.CompilerParams(
            vmem_limit_bytes=32 * 1024 * 1024),
    )(x_fused, t1, t2, tsc, gt, gammas, betas_b)

    # (H*N, W*Cout) -> (H, N, W, Cout) -> NCHW
    return out.reshape(H, N, W, Cout).transpose(1, 3, 0, 2)


# --------------------------- pure-JAX reference ------------------------------ #

def resnet_reference(x_nchw, p):
    x = jnp.transpose(x_nchw, (0, 2, 3, 1))

    def conv(x, w, b, pad, dil):
        y = lax.conv_general_dilated(
            x, w, window_strides=(1, 1), padding=((pad, pad), (pad, pad)),
            rhs_dilation=(dil, dil), dimension_numbers=("NHWC", "HWIO", "NHWC"))
        return y + b

    def bn(x, g, be):
        m = jnp.mean(x, axis=(0, 1, 2))
        v = jnp.var(x, axis=(0, 1, 2))
        return (x - m) * g / jnp.sqrt(v + BN_EPS) + be

    c1 = conv(x, p["w1"], p["b1"], 2, 2)
    a1 = jax.nn.relu(bn(c1, p["g1"], p["be1"]))
    c2 = conv(a1, p["w2"], p["b2"], 1, 1)
    b2 = bn(c2, p["g2"], p["be2"])
    sc = bn(conv(x, p["wsc"], p["bsc"], 0, 1), p["gsc"], p["besc"])
    out = jax.nn.relu(b2 + sc)
    return jnp.transpose(out, (0, 3, 1, 2))


# ----------------------------------- main ------------------------------------ #

if __name__ == "__main__":
    N, Cin, Cout, H, W = 2, 4, 8, 16, 16

    key = jax.random.PRNGKey(0)
    keys = jax.random.split(key, 13)

    params = {
        "w1":  (jax.random.normal(keys[0], (3, 3, Cin, Cout), jnp.float32) * 0.1),
        "b1":  (jax.random.normal(keys[1], (Cout,), jnp.float32) * 0.1),
        "g1":  1.0 + 0.1 * jax.random.normal(keys[2], (Cout,), jnp.float32),
        "be1": 0.1 * jax.random.normal(keys[3], (Cout,), jnp.float32),
        "w2":  (jax.random.normal(keys[4], (3, 3, Cout, Cout), jnp.float32) * 0.1),
        "b2":  (jax.random.normal(keys[5], (Cout,), jnp.float32) * 0.1),
        "g2":  1.0 + 0.1 * jax.random.normal(keys[6], (Cout,), jnp.float32),
        "be2": 0.1 * jax.random.normal(keys[7], (Cout,), jnp.float32),
        "wsc": (jax.random.normal(keys[8], (1, 1, Cin, Cout), jnp.float32) * 0.1),
        "bsc": (jax.random.normal(keys[9], (Cout,), jnp.float32) * 0.1),
        "gsc": 1.0 + 0.1 * jax.random.normal(keys[10], (Cout,), jnp.float32),
        "besc": 0.1 * jax.random.normal(keys[11], (Cout,), jnp.float32),
    }

    x = jax.random.normal(keys[12], (N, Cin, H, W), jnp.float32)   # NCHW input

    fwd = jax.jit(resnet_forward)
    out = jax.block_until_ready(fwd(x, params))
    ref = jax.block_until_ready(resnet_reference(x, params))

    assert out.shape == (N, Cout, H, W), out.shape
    np.testing.assert_allclose(np.asarray(out), np.asarray(ref), rtol=5e-2, atol=5e-2)

    print("KERNEL_OK")
</pallas_src>

<mosaic_0001>
module attributes {stable_mosaic.version = 11 : i64} {
  func.func @kernel(%arg0: memref<32x64xbf16, #tpu.memory_space<vmem>>, %arg1: memref<3x64x128xbf16, #tpu.memory_space<vmem>>, %arg2: memref<3x128x128xbf16, #tpu.memory_space<vmem>>, %arg3: memref<64x128xbf16, #tpu.memory_space<vmem>>, %arg4: memref<8x128xf32, #tpu.memory_space<vmem>>, %arg5: memref<3x8xf32, #tpu.memory_space<vmem>>, %arg6: memref<3x128xf32, #tpu.memory_space<vmem>>, %arg7: memref<32x128xf32, #tpu.memory_space<vmem>>, %arg8: memref<40x64xbf16, #tpu.memory_space<vmem>>, %arg9: memref<40x128xbf16, #tpu.memory_space<vmem>>) attributes {dimension_semantics = [], scalar_prefetch = 0 : i64, scratch_operands = 2 : i64, tpu.core_type = #tpu.core_type<tc>} {
    %c0 = arith.constant 0 : index
    %c0_0 = arith.constant 0 : index
    %0 = vector.load %arg4[%c0, %c0_0] : memref<8x128xf32, #tpu.memory_space<vmem>>, vector<8x128xf32>
    %c0_1 = arith.constant 0 : index
    %c0_2 = arith.constant 0 : index
    %1 = vector.load %arg0[%c0_1, %c0_2] : memref<32x64xbf16, #tpu.memory_space<vmem>>, vector<32x64xbf16>
    %cst = arith.constant 0.000000e+00 : bf16
    %2 = vector.broadcast %cst : bf16 to vector<4x64xbf16>
    %c0_3 = arith.constant 0 : index
    %c0_4 = arith.constant 0 : index
    %3 = vector.load %arg8[%c0_3, %c0_4] : memref<40x64xbf16, #tpu.memory_space<vmem>>, vector<4x64xbf16>
    tpu.vector_store %arg8[%c0_3, %c0_4], %2 {strides = array<i32>} : memref<40x64xbf16, #tpu.memory_space<vmem>>, vector<4x64xbf16>,
    %cst_5 = arith.constant 0.000000e+00 : bf16
    %4 = vector.broadcast %cst_5 : bf16 to vector<4x64xbf16>
    %c36 = arith.constant 36 : index
    %c0_6 = arith.constant 0 : index
    %5 = vector.load %arg8[%c36, %c0_6] : memref<40x64xbf16, #tpu.memory_space<vmem>>, vector<4x64xbf16>
    tpu.vector_store %arg8[%c36, %c0_6], %4 {strides = array<i32>} : memref<40x64xbf16, #tpu.memory_space<vmem>>, vector<4x64xbf16>,
    %c4 = arith.constant 4 : index
    %c0_7 = arith.constant 0 : index
    %6 = vector.load %arg8[%c4, %c0_7] : memref<40x64xbf16, #tpu.memory_space<vmem>>, vector<32x64xbf16>
    tpu.vector_store %arg8[%c4, %c0_7], %1 {strides = array<i32>} : memref<40x64xbf16, #tpu.memory_space<vmem>>, vector<32x64xbf16>,
    %cst_8 = arith.constant 0.000000e+00 : f32
    %7 = vector.broadcast %cst_8 : f32 to vector<32x128xf32>
    %c0_9 = arith.constant 0 : index
    %c0_10 = arith.constant 0 : index
    %8 = vector.load %arg8[%c0_9, %c0_10] : memref<40x64xbf16, #tpu.memory_space<vmem>>, vector<32x64xbf16>
    %c0_11 = arith.constant 0 : index
    %c0_12 = arith.constant 0 : index
    %c0_13 = arith.constant 0 : index
    %9 = vector.load %arg1[%c0_11, %c0_12, %c0_13] : memref<3x64x128xbf16, #tpu.memory_space<vmem>>, vector<1x64x128xbf16>
    %10 = vector.shape_cast %9 : vector<1x64x128xbf16> to vector<64x128xbf16>
    %cst_14 = arith.constant dense<0.000000e+00> : vector<32x128xf32>
    %11 = tpu.matmul %8, %10, %cst_14 {dimension_numbers = #tpu.dot_dimension_numbers<[1], [0], [0], [1], [0, 0, 1, 1], [], []>} : vector<32x64xbf16>, vector<64x128xbf16>, vector<32x128xf32> -> vector<32x128xf32>
    %12 = arith.addf %7, %11 : vector<32x128xf32>
    %c4_15 = arith.constant 4 : index
    %c0_16 = arith.constant 0 : index
    %13 = vector.load %arg8[%c4_15, %c0_16] : memref<40x64xbf16, #tpu.memory_space<vmem>>, vector<32x64xbf16>
    %c1 = arith.constant 1 : index
    %c0_17 = arith.constant 0 : index
    %c0_18 = arith.constant 0 : index
    %14 = vector.load %arg1[%c1, %c0_17, %c0_18] : memref<3x64x128xbf16, #tpu.memory_space<vmem>>, vector<1x64x128xbf16>
    %15 = vector.shape_cast %14 : vector<1x64x128xbf16> to vector<64x128xbf16>
    %cst_19 = arith.constant dense<0.000000e+00> : vector<32x128xf32>
    %16 = tpu.matmul %13, %15, %cst_19 {dimension_numbers = #tpu.dot_dimension_numbers<[1], [0], [0], [1], [0, 0, 1, 1], [], []>} : vector<32x64xbf16>, vector<64x128xbf16>, vector<32x128xf32> -> vector<32x128xf32>
    %17 = arith.addf %12, %16 : vector<32x128xf32>
    %c8 = arith.constant 8 : index
    %c0_20 = arith.constant 0 : index
    %18 = vector.load %arg8[%c8, %c0_20] : memref<40x64xbf16, #tpu.memory_space<vmem>>, vector<32x64xbf16>
    %c2 = arith.constant 2 : index
    %c0_21 = arith.constant 0 : index
    %c0_22 = arith.constant 0 : index
    %19 = vector.load %arg1[%c2, %c0_21, %c0_22] : memref<3x64x128xbf16, #tpu.memory_space<vmem>>, vector<1x64x128xbf16>
    %20 = vector.shape_cast %19 : vector<1x64x128xbf16> to vector<64x128xbf16>
    %cst_23 = arith.constant dense<0.000000e+00> : vector<32x128xf32>
    %21 = tpu.matmul %18, %20, %cst_23 {dimension_numbers = #tpu.dot_dimension_numbers<[1], [0], [0], [1], [0, 0, 1, 1], [], []>} : vector<32x64xbf16>, vector<64x128xbf16>, vector<32x128xf32> -> vector<32x128xf32>
    %22 = arith.addf %17, %21 : vector<32x128xf32>
    %c0_24 = arith.constant 0 : index
    %c0_25 = arith.constant 0 : index
    %23 = vector.load %arg5[%c0_24, %c0_25] : memref<3x8xf32, #tpu.memory_space<vmem>>, vector<1x8xf32>
    %c0_26 = arith.constant 0 : index
    %c0_27 = arith.constant 0 : index
    %24 = vector.load %arg6[%c0_26, %c0_27] : memref<3x128xf32, #tpu.memory_space<vmem>>, vector<1x128xf32>
    %cst_28 = arith.constant dense<0.000000e+00> : vector<128xf32>
    %25 = vector.multi_reduction <add>, %22, %cst_28 [0] : vector<32x128xf32> to vector<128xf32>
    %26 = vector.shape_cast %25 : vector<128xf32> to vector<1x128xf32>
    %cst_29 = arith.constant dense<0.000000e+00> : vector<1x8xf32>
    %27 = tpu.matmul %26, %0, %cst_29 {dimension_numbers = #tpu.dot_dimension_numbers<[1], [1], [0], [0], [0, 0, 1, 0], [], []>} : vector<1x128xf32>, vector<8x128xf32>, vector<1x8xf32> -> vector<1x8xf32>
    %cst_30 = arith.constant 5.120000e+02 : f32
    %28 = vector.broadcast %cst_30 : f32 to vector<1x8xf32>
    %29 = arith.divf %27, %28 : vector<1x8xf32>
    %cst_31 = arith.constant dense<0.000000e+00> : vector<1x128xf32>
    %30 = tpu.matmul %29, %0, %cst_31 {dimension_numbers = #tpu.dot_dimension_numbers<[1], [0], [0], [1], [0, 0, 1, 1], [], []>} : vector<1x8xf32>, vector<8x128xf32>, vector<1x128xf32> -> vector<1x128xf32>
    %31 = vector.broadcast %30 : vector<1x128xf32> to vector<32x128xf32>
    %32 = arith.subf %22, %31 : vector<32x128xf32>
    %33 = arith.mulf %32, %32 : vector<32x128xf32>
    %cst_32 = arith.constant dense<0.000000e+00> : vector<128xf32>
    %34 = vector.multi_reduction <add>, %33, %cst_32 [0] : vector<32x128xf32> to vector<128xf32>
    %35 = vector.shape_cast %34 : vector<128xf32> to vector<1x128xf32>
    %cst_33 = arith.constant dense<0.000000e+00> : vector<1x8xf32>
    %36 = tpu.matmul %35, %0, %cst_33 {dimension_numbers = #tpu.dot_dimension_numbers<[1], [1], [0], [0], [0, 0, 1, 0], [], []>} : vector<1x128xf32>, vector<8x128xf32>, vector<1x8xf32> -> vector<1x8xf32>
    %cst_34 = arith.constant 5.120000e+02 : f32
    %37 = vector.broadcast %cst_34 : f32 to vector<1x8xf32>
    %38 = arith.divf %36, %37 : vector<1x8xf32>
    %cst_35 = arith.constant 9.99999974E-6 : f32
    %39 = vector.broadcast %cst_35 : f32 to vector<1x8xf32>
    %40 = arith.addf %38, %39 : vector<1x8xf32>
    %41 = math.rsqrt %40 : vector<1x8xf32>
    %42 = arith.mulf %23, %41 : vector<1x8xf32>
    %cst_36 = arith.constant dense<0.000000e+00> : vector<1x128xf32>
    %43 = tpu.matmul %42, %0, %cst_36 {dimension_numbers = #tpu.dot_dimension_numbers<[1], [0], [0], [1], [0, 0, 1, 1], [], []>} : vector<1x8xf32>, vector<8x128xf32>, vector<1x128xf32> -> vector<1x128xf32>
    %44 = vector.broadcast %43 : vector<1x128xf32> to vector<32x128xf32>
    %45 = arith.mulf %32, %44 : vector<32x128xf32>
    %46 = vector.broadcast %24 : vector<1x128xf32> to vector<32x128xf32>
    %47 = arith.addf %45, %46 : vector<32x128xf32>
    %cst_37 = arith.constant 0.000000e+00 : f32
    %48 = vector.broadcast %cst_37 : f32 to vector<32x128xf32>
    %49 = arith.maximumf %47, %48 : vector<32x128xf32>
    %cst_38 = arith.constant 0.000000e+00 : bf16
    %50 = vector.broadcast %cst_38 : bf16 to vector<2x128xbf16>
    %c0_39 = arith.constant 0 : index
    %c0_40 = arith.constant 0 : index
    %51 = vector.load %arg9[%c0_39, %c0_40] : memref<40x128xbf16, #tpu.memory_space<vmem>>, vector<2x128xbf16>
    tpu.vector_store %arg9[%c0_39, %c0_40], %50 {strides = array<i32>} : memref<40x128xbf16, #tpu.memory_space<vmem>>, vector<2x128xbf16>,
    %cst_41 = arith.constant 0.000000e+00 : bf16
    %52 = vector.broadcast %cst_41 : bf16 to vector<6x128xbf16>
    %c34 = arith.constant 34 : index
    %c0_42 = arith.constant 0 : index
    %53 = vector.load %arg9[%c34, %c0_42] : memref<40x128xbf16, #tpu.memory_space<vmem>>, vector<6x128xbf16>
    tpu.vector_store %arg9[%c34, %c0_42], %52 {strides = array<i32>} : memref<40x128xbf16, #tpu.memory_space<vmem>>, vector<6x128xbf16>,
    %54 = arith.truncf %49 : vector<32x128xf32> to vector<32x128xbf16>
    %c2_43 = arith.constant 2 : index
    %c0_44 = arith.constant 0 : index
    %55 = vector.load %arg9[%c2_43, %c0_44] : memref<40x128xbf16, #tpu.memory_space<vmem>>, vector<32x128xbf16>
    tpu.vector_store %arg9[%c2_43, %c0_44], %54 {strides = array<i32>} : memref<40x128xbf16, #tpu.memory_space<vmem>>, vector<32x128xbf16>,
    %cst_45 = arith.constant 0.000000e+00 : f32
    %56 = vector.broadcast %cst_45 : f32 to vector<32x128xf32>
    %c0_46 = arith.constant 0 : index
    %c0_47 = arith.constant 0 : index
    %57 = vector.load %arg9[%c0_46, %c0_47] : memref<40x128xbf16, #tpu.memory_space<vmem>>, vector<32x128xbf16>
    %c0_48 = arith.constant 0 : index
    %c0_49 = arith.constant 0 : index
    %c0_50 = arith.constant 0 : index
    %58 = vector.load %arg2[%c0_48, %c0_49, %c0_50] : memref<3x128x128xbf16, #tpu.memory_space<vmem>>, vector<1x128x128xbf16>
    %59 = vector.shape_cast %58 : vector<1x128x128xbf16> to vector<128x128xbf16>
    %cst_51 = arith.constant dense<0.000000e+00> : vector<32x128xf32>
    %60 = tpu.matmul %57, %59, %cst_51 {dimension_numbers = #tpu.dot_dimension_numbers<[1], [0], [0], [1], [0, 0, 1, 1], [], []>} : vector<32x128xbf16>, vector<128x128xbf16>, vector<32x128xf32> -> vector<32x128xf32>
    %61 = arith.addf %56, %60 : vector<32x128xf32>
    %c2_52 = arith.constant 2 : index
    %c0_53 = arith.constant 0 : index
    %62 = vector.load %arg9[%c2_52, %c0_53] : memref<40x128xbf16, #tpu.memory_space<vmem>>, vector<32x128xbf16>
    %c1_54 = arith.constant 1 : index
    %c0_55 = arith.constant 0 : index
    %c0_56 = arith.constant 0 : index
    %63 = vector.load %arg2[%c1_54, %c0_55, %c0_56] : memref<3x128x128xbf16, #tpu.memory_space<vmem>>, vector<1x128x128xbf16>
    %64 = vector.shape_cast %63 : vector<1x128x128xbf16> to vector<128x128xbf16>
    %cst_57 = arith.constant dense<0.000000e+00> : vector<32x128xf32>
    %65 = tpu.matmul %62, %64, %cst_57 {dimension_numbers = #tpu.dot_dimension_numbers<[1], [0], [0], [1], [0, 0, 1, 1], [], []>} : vector<32x128xbf16>, vector<128x128xbf16>, vector<32x128xf32> -> vector<32x128xf32>
    %66 = arith.addf %61, %65 : vector<32x128xf32>
    %c4_58 = arith.constant 4 : index
    %c0_59 = arith.constant 0 : index
    %67 = vector.load %arg9[%c4_58, %c0_59] : memref<40x128xbf16, #tpu.memory_space<vmem>>, vector<32x128xbf16>
    %c2_60 = arith.constant 2 : index
    %c0_61 = arith.constant 0 : index
    %c0_62 = arith.constant 0 : index
    %68 = vector.load %arg2[%c2_60, %c0_61, %c0_62] : memref<3x128x128xbf16, #tpu.memory_space<vmem>>, vector<1x128x128xbf16>
    %69 = vector.shape_cast %68 : vector<1x128x128xbf16> to vector<128x128xbf16>
    %cst_63 = arith.constant dense<0.000000e+00> : vector<32x128xf32>
    %70 = tpu.matmul %67, %69, %cst_63 {dimension_numbers = #tpu.dot_dimension_numbers<[1], [0], [0], [1], [0, 0, 1, 1], [], []>} : vector<32x128xbf16>, vector<128x128xbf16>, vector<32x128xf32> -> vector<32x128xf32>
    %71 = arith.addf %66, %70 : vector<32x128xf32>
    %c1_64 = arith.constant 1 : index
    %c0_65 = arith.constant 0 : index
    %72 = vector.load %arg5[%c1_64, %c0_65] : memref<3x8xf32, #tpu.memory_space<vmem>>, vector<1x8xf32>
    %c1_66 = arith.constant 1 : index
    %c0_67 = arith.constant 0 : index
    %73 = vector.load %arg6[%c1_66, %c0_67] : memref<3x128xf32, #tpu.memory_space<vmem>>, vector<1x128xf32>
    %cst_68 = arith.constant dense<0.000000e+00> : vector<128xf32>
    %74 = vector.multi_reduction <add>, %71, %cst_68 [0] : vector<32x128xf32> to vector<128xf32>
    %75 = vector.shape_cast %74 : vector<128xf32> to vector<1x128xf32>
    %cst_69 = arith.constant dense<0.000000e+00> : vector<1x8xf32>
    %76 = tpu.matmul %75, %0, %cst_69 {dimension_numbers = #tpu.dot_dimension_numbers<[1], [1], [0], [0], [0, 0, 1, 0], [], []>} : vector<1x128xf32>, vector<8x128xf32>, vector<1x8xf32> -> vector<1x8xf32>
    %cst_70 = arith.constant 5.120000e+02 : f32
    %77 = vector.broadcast %cst_70 : f32 to vector<1x8xf32>
    %78 = arith.divf %76, %77 : vector<1x8xf32>
    %cst_71 = arith.constant dense<0.000000e+00> : vector<1x128xf32>
    %79 = tpu.matmul %78, %0, %cst_71 {dimension_numbers = #tpu.dot_dimension_numbers<[1], [0], [0], [1], [0, 0, 1, 1], [], []>} : vector<1x8xf32>, vector<8x128xf32>, vector<1x128xf32> -> vector<1x128xf32>
    %80 = vector.broadcast %79 : vector<1x128xf32> to vector<32x128xf32>
    %81 = arith.subf %71, %80 : vector<32x128xf32>
    %82 = arith.mulf %81, %81 : vector<32x128xf32>
    %cst_72 = arith.constant dense<0.000000e+00> : vector<128xf32>
    %83 = vector.multi_reduction <add>, %82, %cst_72 [0] : vector<32x128xf32> to vector<128xf32>
    %84 = vector.shape_cast %83 : vector<128xf32> to vector<1x128xf32>
    %cst_73 = arith.constant dense<0.000000e+00> : vector<1x8xf32>
    %85 = tpu.matmul %84, %0, %cst_73 {dimension_numbers = #tpu.dot_dimension_numbers<[1], [1], [0], [0], [0, 0, 1, 0], [], []>} : vector<1x128xf32>, vector<8x128xf32>, vector<1x8xf32> -> vector<1x8xf32>
    %cst_74 = arith.constant 5.120000e+02 : f32
    %86 = vector.broadcast %cst_74 : f32 to vector<1x8xf32>
    %87 = arith.divf %85, %86 : vector<1x8xf32>
    %cst_75 = arith.constant 9.99999974E-6 : f32
    %88 = vector.broadcast %cst_75 : f32 to vector<1x8xf32>
    %89 = arith.addf %87, %88 : vector<1x8xf32>
    %90 = math.rsqrt %89 : vector<1x8xf32>
    %91 = arith.mulf %72, %90 : vector<1x8xf32>
    %cst_76 = arith.constant dense<0.000000e+00> : vector<1x128xf32>
    %92 = tpu.matmul %91, %0, %cst_76 {dimension_numbers = #tpu.dot_dimension_numbers<[1], [0], [0], [1], [0, 0, 1, 1], [], []>} : vector<1x8xf32>, vector<8x128xf32>, vector<1x128xf32> -> vector<1x128xf32>
    %93 = vector.broadcast %92 : vector<1x128xf32> to vector<32x128xf32>
    %94 = arith.mulf %81, %93 : vector<32x128xf32>
    %95 = vector.broadcast %73 : vector<1x128xf32> to vector<32x128xf32>
    %96 = arith.addf %94, %95 : vector<32x128xf32>
    %c0_77 = arith.constant 0 : index
    %c0_78 = arith.constant 0 : index
    %97 = vector.load %arg3[%c0_77, %c0_78] : memref<64x128xbf16, #tpu.memory_space<vmem>>, vector<64x128xbf16>
    %cst_79 = arith.constant dense<0.000000e+00> : vector<32x128xf32>
    %98 = tpu.matmul %1, %97, %cst_79 {dimension_numbers = #tpu.dot_dimension_numbers<[1], [0], [0], [1], [0, 0, 1, 1], [], []>} : vector<32x64xbf16>, vector<64x128xbf16>, vector<32x128xf32> -> vector<32x128xf32>
    %c2_80 = arith.constant 2 : index
    %c0_81 = arith.constant 0 : index
    %99 = vector.load %arg5[%c2_80, %c0_81] : memref<3x8xf32, #tpu.memory_space<vmem>>, vector<1x8xf32>
    %c2_82 = arith.constant 2 : index
    %c0_83 = arith.constant 0 : index
    %100 = vector.load %arg6[%c2_82, %c0_83] : memref<3x128xf32, #tpu.memory_space<vmem>>, vector<1x128xf32>
    %cst_84 = arith.constant dense<0.000000e+00> : vector<128xf32>
    %101 = vector.multi_reduction <add>, %98, %cst_84 [0] : vector<32x128xf32> to vector<128xf32>
    %102 = vector.shape_cast %101 : vector<128xf32> to vector<1x128xf32>
    %cst_85 = arith.constant dense<0.000000e+00> : vector<1x8xf32>
    %103 = tpu.matmul %102, %0, %cst_85 {dimension_numbers = #tpu.dot_dimension_numbers<[1], [1], [0], [0], [0, 0, 1, 0], [], []>} : vector<1x128xf32>, vector<8x128xf32>, vector<1x8xf32> -> vector<1x8xf32>
    %cst_86 = arith.constant 5.120000e+02 : f32
    %104 = vector.broadcast %cst_86 : f32 to vector<1x8xf32>
    %105 = arith.divf %103, %104 : vector<1x8xf32>
    %cst_87 = arith.constant dense<0.000000e+00> : vector<1x128xf32>
    %106 = tpu.matmul %105, %0, %cst_87 {dimension_numbers = #tpu.dot_dimension_numbers<[1], [0], [0], [1], [0, 0, 1, 1], [], []>} : vector<1x8xf32>, vector<8x128xf32>, vector<1x128xf32> -> vector<1x128xf32>
    %107 = vector.broadcast %106 : vector<1x128xf32> to vector<32x128xf32>
    %108 = arith.subf %98, %107 : vector<32x128xf32>
    %109 = arith.mulf %108, %108 : vector<32x128xf32>
    %cst_88 = arith.constant dense<0.000000e+00> : vector<128xf32>
    %110 = vector.multi_reduction <add>, %109, %cst_88 [0] : vector<32x128xf32> to vector<128xf32>
    %111 = vector.shape_cast %110 : vector<128xf32> to vector<1x128xf32>
    %cst_89 = arith.constant dense<0.000000e+00> : vector<1x8xf32>
    %112 = tpu.matmul %111, %0, %cst_89 {dimension_numbers = #tpu.dot_dimension_numbers<[1], [1], [0], [0], [0, 0, 1, 0], [], []>} : vector<1x128xf32>, vector<8x128xf32>, vector<1x8xf32> -> vector<1x8xf32>
    %cst_90 = arith.constant 5.120000e+02 : f32
    %113 = vector.broadcast %cst_90 : f32 to vector<1x8xf32>
    %114 = arith.divf %112, %113 : vector<1x8xf32>
    %cst_91 = arith.constant 9.99999974E-6 : f32
    %115 = vector.broadcast %cst_91 : f32 to vector<1x8xf32>
    %116 = arith.addf %114, %115 : vector<1x8xf32>
    %117 = math.rsqrt %116 : vector<1x8xf32>
    %118 = arith.mulf %99, %117 : vector<1x8xf32>
    %cst_92 = arith.constant dense<0.000000e+00> : vector<1x128xf32>
    %119 = tpu.matmul %118, %0, %cst_92 {dimension_numbers = #tpu.dot_dimension_numbers<[1], [0], [0], [1], [0, 0, 1, 1], [], []>} : vector<1x8xf32>, vector<8x128xf32>, vector<1x128xf32> -> vector<1x128xf32>
    %120 = vector.broadcast %119 : vector<1x128xf32> to vector<32x128xf32>
    %121 = arith.mulf %108, %120 : vector<32x128xf32>
    %122 = vector.broadcast %100 : vector<1x128xf32> to vector<32x128xf32>
    %123 = arith.addf %121, %122 : vector<32x128xf32>
    %124 = arith.addf %96, %123 : vector<32x128xf32>
    %cst_93 = arith.constant 0.000000e+00 : f32
    %125 = vector.broadcast %cst_93 : f32 to vector<32x128xf32>
    %126 = arith.maximumf %124, %125 : vector<32x128xf32>
    %c0_94 = arith.constant 0 : index
    %c0_95 = arith.constant 0 : index
    %127 = vector.load %arg7[%c0_94, %c0_95] : memref<32x128xf32, #tpu.memory_space<vmem>>, vector<32x128xf32>
    tpu.vector_store %arg7[%c0_94, %c0_95], %126 {strides = array<i32>} : memref<32x128xf32, #tpu.memory_space<vmem>>, vector<32x128xf32>,
    return
  }
}

</mosaic_0001>

<llo_original>
// kernel: tile.14
$region0: #{tile.14}
  %s0 = inlined_call_operand.vmem [shape: f32[8,16,8], index: 0, kind: input, shape index: {}]
  %s1 = inlined_call_operand.vmem [shape: f32[8,128], index: 1, kind: output, shape index: {}]
  %s2 = smov 3
  %v3 = vld [vmem:[%s0] ss:$16 sm:%s2]
  %s4 = smov 12
  %v5 = vld [vmem:[%s0] ss:$16 sm:%s4]
  %vm6 = vcmask 1043458
  %v7 = vsel %vm6, %v5, %v3
  %s8 = smov 48
  %v9 = vld [vmem:[%s0] ss:$16 sm:%s8]
  %vm10 = vcmask 1045508
  %v11 = vsel %vm10, %v9, %v7
  %s12 = smov 192
  %v13 = vld [vmem:[%s0] ss:$16 sm:%s12]
  %vm14 = vcmask 1047558
  %v15 = vsel %vm14, %v13, %v11
  %vm16 = vcmask 64512
  %17 = vst.msk [vmem:[%s1] sm:$0xff] %vm16, %v15
  %s18 = scalar_lea.vmem %s0, 15
  %s19 = smov 3
  %v20 = vld [vmem:[%s18] ss:$16 sm:%s19]
  %s21 = scalar_lea.vmem %s0, 15
  %s22 = smov 12
  %v23 = vld [vmem:[%s21] ss:$16 sm:%s22]
  %vm24 = vcmask 1043458
  %v25 = vsel %vm24, %v23, %v20
  %s26 = scalar_lea.vmem %s0, 15
  %s27 = smov 48
  %v28 = vld [vmem:[%s26] ss:$16 sm:%s27]
  %vm29 = vcmask 1045508
  %v30 = vsel %vm29, %v28, %v25
  %s31 = scalar_lea.vmem %s0, 15
  %s32 = smov 192
  %v33 = vld [vmem:[%s31] ss:$16 sm:%s32]
  %vm34 = vcmask 1047558
  %v35 = vsel %vm34, %v33, %v30
  %36 = vrot.lane.b32.xlu0 %v35, 120
  %v37 = vpop.permute.xlu0 %36
  %vm38 = vcmask 1048512
  %39 = vst.msk [vmem:[%s1] sm:$0xff] %vm38, %v37
  %s40 = scalar_lea.vmem %s0, 14
  %s41 = smov 3
  %v42 = vld [vmem:[%s40] ss:$16 sm:%s41]
  %s43 = scalar_lea.vmem %s0, 14
  %s44 = smov 12
  %v45 = vld [vmem:[%s43] ss:$16 sm:%s44]
  %vm46 = vcmask 1043458
  %v47 = vsel %vm46, %v45, %v42
  %s48 = scalar_lea.vmem %s0, 14
  %s49 = smov 48
  %v50 = vld [vmem:[%s48] ss:$16 sm:%s49]
  %vm51 = vcmask 1045508
  %v52 = vsel %vm51, %v50, %v47
  %s53 = scalar_lea.vmem %s0, 14
  %s54 = smov 192
  %v55 = vld [vmem:[%s53] ss:$16 sm:%s54]
  %vm56 = vcmask 1047558
  %v57 = vsel %vm56, %v55, %v52
  %58 = vrot.lane.b32.xlu0 %v57, 112
  %v59 = vpop.permute.xlu0 %58
  %vm60 = vcmask 982912
  %61 = vst.msk [vmem:[%s1] sm:$0xff] %vm60, %v59
  %s62 = scalar_lea.vmem %s0, 13
  %s63 = smov 3
  %v64 = vld [vmem:[%s62] ss:$16 sm:%s63]
  %s65 = scalar_lea.vmem %s0, 13
  %s66 = smov 12
  %v67 = vld [vmem:[%s65] ss:$16 sm:%s66]
  %vm68 = vcmask 1043458
  %v69 = vsel %vm68, %v67, %v64
  %s70 = scalar_lea.vmem %s0, 13
  %s71 = smov 48
  %v72 = vld [vmem:[%s70] ss:$16 sm:%s71]
  %vm73 = vcmask 1045508
  %v74 = vsel %vm73, %v72, %v69
  %s75 = scalar_lea.vmem %s0, 13
  %s76 = smov 192
  %v77 = vld [vmem:[%s75] ss:$16 sm:%s76]
  %vm78 = vcmask 1047558
  %v79 = vsel %vm78, %v77, %v74
  %80 = vrot.lane.b32.xlu0 %v79, 104
  %v81 = vpop.permute.xlu0 %80
  %vm82 = vcmask 917312
  %83 = vst.msk [vmem:[%s1] sm:$0xff] %vm82, %v81
  %s84 = scalar_lea.vmem %s0, 12
  %s85 = smov 3
  %v86 = vld [vmem:[%s84] ss:$16 sm:%s85]
  %s87 = scalar_lea.vmem %s0, 12
  %s88 = smov 12
  %v89 = vld [vmem:[%s87] ss:$16 sm:%s88]
  %vm90 = vcmask 1043458
  %v91 = vsel %vm90, %v89, %v86
  %s92 = scalar_lea.vmem %s0, 12
  %s93 = smov 48
  %v94 = vld [vmem:[%s92] ss:$16 sm:%s93]
  %vm95 = vcmask 1045508
  %v96 = vsel %vm95, %v94, %v91
  %s97 = scalar_lea.vmem %s0, 12
  %s98 = smov 192
  %v99 = vld [vmem:[%s97] ss:$16 sm:%s98]
  %vm100 = vcmask 1047558
  %v101 = vsel %vm100, %v99, %v96
  %102 = vrot.lane.b32.xlu0 %v101, 96
  %v103 = vpop.permute.xlu0 %102
  %vm104 = vcmask 851712
  %105 = vst.msk [vmem:[%s1] sm:$0xff] %vm104, %v103
  %s106 = scalar_lea.vmem %s0, 11
  %s107 = smov 3
  %v108 = vld [vmem:[%s106] ss:$16 sm:%s107]
  %s109 = scalar_lea.vmem %s0, 11
  %s110 = smov 12
  %v111 = vld [vmem:[%s109] ss:$16 sm:%s110]
  %vm112 = vcmask 1043458
  %v113 = vsel %vm112, %v111, %v108
  %s114 = scalar_lea.vmem %s0, 11
  %s115 = smov 48
  %v116 = vld [vmem:[%s114] ss:$16 sm:%s115]
  %vm117 = vcmask 1045508
  %v118 = vsel %vm117, %v116, %v113
  %s119 = scalar_lea.vmem %s0, 11
  %s120 = smov 192
  %v121 = vld [vmem:[%s119] ss:$16 sm:%s120]
  %vm122 = vcmask 1047558
  %v123 = vsel %vm122, %v121, %v118
  %124 = vrot.lane.b32.xlu0 %v123, 88
  %v125 = vpop.permute.xlu0 %124
  %vm126 = vcmask 786112
  %127 = vst.msk [vmem:[%s1] sm:$0xff] %vm126, %v125
  %s128 = scalar_lea.vmem %s0, 10
  %s129 = smov 3
  %v130 = vld [vmem:[%s128] ss:$16 sm:%s129]
  %s131 = scalar_lea.vmem %s0, 10
  %s132 = smov 12
  %v133 = vld [vmem:[%s131] ss:$16 sm:%s132]
  %vm134 = vcmask 1043458
  %v135 = vsel %vm134, %v133, %v130
  %s136 = scalar_lea.vmem %s0, 10
  %s137 = smov 48
  %v138 = vld [vmem:[%s136] ss:$16 sm:%s137]
  %vm139 = vcmask 1045508
  %v140 = vsel %vm139, %v138, %v135
  %s141 = scalar_lea.vmem %s0, 10
  %s142 = smov 192
  %v143 = vld [vmem:[%s141] ss:$16 sm:%s142]
  %vm144 = vcmask 1047558
  %v145 = vsel %vm144, %v143, %v140
  %146 = vrot.lane.b32.xlu0 %v145, 80
  %v147 = vpop.permute.xlu0 %146
  %vm148 = vcmask 720512
  %149 = vst.msk [vmem:[%s1] sm:$0xff] %vm148, %v147
  %s150 = scalar_lea.vmem %s0, 9
  %s151 = smov 3
  %v152 = vld [vmem:[%s150] ss:$16 sm:%s151]
  %s153 = scalar_lea.vmem %s0, 9
  %s154 = smov 12
  %v155 = vld [vmem:[%s153] ss:$16 sm:%s154]
  %vm156 = vcmask 1043458
  %v157 = vsel %vm156, %v155, %v152
  %s158 = scalar_lea.vmem %s0, 9
  %s159 = smov 48
  %v160 = vld [vmem:[%s158] ss:$16 sm:%s159]
  %vm161 = vcmask 1045508
  %v162 = vsel %vm161, %v160, %v157
  %s163 = scalar_lea.vmem %s0, 9
  %s164 = smov 192
  %v165 = vld [vmem:[%s163] ss:$16 sm:%s164]
  %vm166 = vcmask 1047558
  %v167 = vsel %vm166, %v165, %v162
  %168 = vrot.lane.b32.xlu0 %v167, 72
  %v169 = vpop.permute.xlu0 %168
  %vm170 = vcmask 654912
  %171 = vst.msk [vmem:[%s1] sm:$0xff] %vm170, %v169
  %s172 = scalar_lea.vmem %s0, 8
  %s173 = smov 3
  %v174 = vld [vmem:[%s172] ss:$16 sm:%s173]
  %s175 = scalar_lea.vmem %s0, 8
  %s176 = smov 12
  %v177 = vld [vmem:[%s175] ss:$16 sm:%s176]
  %vm178 = vcmask 1043458
  %v179 = vsel %vm178, %v177, %v174
  %s180 = scalar_lea.vmem %s0, 8
  %s181 = smov 48
  %v182 = vld [vmem:[%s180] ss:$16 sm:%s181]
  %vm183 = vcmask 1045508
  %v184 = vsel %vm183, %v182, %v179
  %s185 = scalar_lea.vmem %s0, 8
  %s186 = smov 192
  %v187 = vld [vmem:[%s185] ss:$16 sm:%s186]
  %vm188 = vcmask 1047558
  %v189 = vsel %vm188, %v187, %v184
  %190 = vrot.lane.b32.xlu0 %v189, 64
  %v191 = vpop.permute.xlu0 %190
  %vm192 = vcmask 589312
  %193 = vst.msk [vmem:[%s1] sm:$0xff] %vm192, %v191
  %s194 = scalar_lea.vmem %s0, 7
  %s195 = smov 3
  %v196 = vld [vmem:[%s194] ss:$16 sm:%s195]
  %s197 = scalar_lea.vmem %s0, 7
  %s198 = smov 12
  %v199 = vld [vmem:[%s197] ss:$16 sm:%s198]
  %vm200 = vcmask 1043458
  %v201 = vsel %vm200, %v199, %v196
  %s202 = scalar_lea.vmem %s0, 7
  %s203 = smov 48
  %v204 = vld [vmem:[%s202] ss:$16 sm:%s203]
  %vm205 = vcmask 1045508
  %v206 = vsel %vm205, %v204, %v201
  %s207 = scalar_lea.vmem %s0, 7
  %s208 = smov 192
  %v209 = vld [vmem:[%s207] ss:$16 sm:%s208]
  %vm210 = vcmask 1047558
  %v211 = vsel %vm210, %v209, %v206
  %212 = vrot.lane.b32.xlu0 %v211, 56
  %v213 = vpop.permute.xlu0 %212
  %vm214 = vcmask 523712
  %215 = vst.msk [vmem:[%s1] sm:$0xff] %vm214, %v213
  %s216 = scalar_lea.vmem %s0, 6
  %s217 = smov 3
  %v218 = vld [vmem:[%s216] ss:$16 sm:%s217]
  %s219 = scalar_lea.vmem %s0, 6
  %s220 = smov 12
  %v221 = vld [vmem:[%s219] ss:$16 sm:%s220]
  %vm222 = vcmask 1043458
  %v223 = vsel %vm222, %v221, %v218
  %s224 = scalar_lea.vmem %s0, 6
  %s225 = smov 48
  %v226 = vld [vmem:[%s224] ss:$16 sm:%s225]
  %vm227 = vcmask 1045508
  %v228 = vsel %vm227, %v226, %v223
  %s229 = scalar_lea.vmem %s0, 6
  %s230 = smov 192
  %v231 = vld [vmem:[%s229] ss:$16 sm:%s230]
  %vm232 = vcmask 1047558
  %v233 = vsel %vm232, %v231, %v228
  %234 = vrot.lane.b32.xlu0 %v233, 48
  %v235 = vpop.permute.xlu0 %234
  %vm236 = vcmask 458112
  %237 = vst.msk [vmem:[%s1] sm:$0xff] %vm236, %v235
  %s238 = scalar_lea.vmem %s0, 5
  %s239 = smov 3
  %v240 = vld [vmem:[%s238] ss:$16 sm:%s239]
  %s241 = scalar_lea.vmem %s0, 5
  %s242 = smov 12
  %v243 = vld [vmem:[%s241] ss:$16 sm:%s242]
  %vm244 = vcmask 1043458
  %v245 = vsel %vm244, %v243, %v240
  %s246 = scalar_lea.vmem %s0, 5
  %s247 = smov 48
  %v248 = vld [vmem:[%s246] ss:$16 sm:%s247]
  %vm249 = vcmask 1045508
  %v250 = vsel %vm249, %v248, %v245
  %s251 = scalar_lea.vmem %s0, 5
  %s252 = smov 192
  %v253 = vld [vmem:[%s251] ss:$16 sm:%s252]
  %vm254 = vcmask 1047558
  %v255 = vsel %vm254, %v253, %v250
  %256 = vrot.lane.b32.xlu0 %v255, 40
  %v257 = vpop.permute.xlu0 %256
  %vm258 = vcmask 392512
  %259 = vst.msk [vmem:[%s1] sm:$0xff] %vm258, %v257
  %s260 = scalar_lea.vmem %s0, 4
  %s261 = smov 3
  %v262 = vld [vmem:[%s260] ss:$16 sm:%s261]
  %s263 = scalar_lea.vmem %s0, 4
  %s264 = smov 12
  %v265 = vld [vmem:[%s263] ss:$16 sm:%s264]
  %vm266 = vcmask 1043458
  %v267 = vsel %vm266, %v265, %v262
  %s268 = scalar_lea.vmem %s0, 4
  %s269 = smov 48
  %v270 = vld [vmem:[%s268] ss:$16 sm:%s269]
  %vm271 = vcmask 1045508
  %v272 = vsel %vm271, %v270, %v267
  %s273 = scalar_lea.vmem %s0, 4
  %s274 = smov 192
  %v275 = vld [vmem:[%s273] ss:$16 sm:%s274]
  %vm276 = vcmask 1047558
  %v277 = vsel %vm276, %v275, %v272
  %278 = vrot.lane.b32.xlu0 %v277, 32
  %v279 = vpop.permute.xlu0 %278
  %vm280 = vcmask 326912
  %281 = vst.msk [vmem:[%s1] sm:$0xff] %vm280, %v279
  %s282 = scalar_lea.vmem %s0, 3
  %s283 = smov 3
  %v284 = vld [vmem:[%s282] ss:$16 sm:%s283]
  %s285 = scalar_lea.vmem %s0, 3
  %s286 = smov 12
  %v287 = vld [vmem:[%s285] ss:$16 sm:%s286]
  %vm288 = vcmask 1043458
  %v289 = vsel %vm288, %v287, %v284
  %s290 = scalar_lea.vmem %s0, 3
  %s291 = smov 48
  %v292 = vld [vmem:[%s290] ss:$16 sm:%s291]
  %vm293 = vcmask 1045508
  %v294 = vsel %vm293, %v292, %v289
  %s295 = scalar_lea.vmem %s0, 3
  %s296 = smov 192
  %v297 = vld [vmem:[%s295] ss:$16 sm:%s296]
  %vm298 = vcmask 1047558
  %v299 = vsel %vm298, %v297, %v294
  %300 = vrot.lane.b32.xlu0 %v299, 24
  %v301 = vpop.permute.xlu0 %300
  %vm302 = vcmask 261312
  %303 = vst.msk [vmem:[%s1] sm:$0xff] %vm302, %v301
  %s304 = scalar_lea.vmem %s0, 2
  %s305 = smov 3
  %v306 = vld [vmem:[%s304] ss:$16 sm:%s305]
  %s307 = scalar_lea.vmem %s0, 2
  %s308 = smov 12
  %v309 = vld [vmem:[%s307] ss:$16 sm:%s308]
  %vm310 = vcmask 1043458
  %v311 = vsel %vm310, %v309, %v306
  %s312 = scalar_lea.vmem %s0, 2
  %s313 = smov 48
  %v314 = vld [vmem:[%s312] ss:$16 sm:%s313]
  %vm315 = vcmask 1045508
  %v316 = vsel %vm315, %v314, %v311
  %s317 = scalar_lea.vmem %s0, 2
  %s318 = smov 192
  %v319 = vld [vmem:[%s317] ss:$16 sm:%s318]
  %vm320 = vcmask 1047558
  %v321 = vsel %vm320, %v319, %v316
  %322 = vrot.lane.b32.xlu0 %v321, 16
  %v323 = vpop.permute.xlu0 %322
  %vm324 = vcmask 195712
  %325 = vst.msk [vmem:[%s1] sm:$0xff] %vm324, %v323
  %s326 = scalar_lea.vmem %s0, 1
  %s327 = smov 3
  %v328 = vld [vmem:[%s326] ss:$16 sm:%s327]
  %s329 = scalar_lea.vmem %s0, 1
  %s330 = smov 12
  %v331 = vld [vmem:[%s329] ss:$16 sm:%s330]
  %vm332 = vcmask 1043458
  %v333 = vsel %vm332, %v331, %v328
  %s334 = scalar_lea.vmem %s0, 1
  %s335 = smov 48
  %v336 = vld [vmem:[%s334] ss:$16 sm:%s335]
  %vm337 = vcmask 1045508
  %v338 = vsel %vm337, %v336, %v333
  %s339 = scalar_lea.vmem %s0, 1
  %s340 = smov 192
  %v341 = vld [vmem:[%s339] ss:$16 sm:%s340]
  %vm342 = vcmask 1047558
  %v343 = vsel %vm342, %v341, %v338
  %344 = vrot.lane.b32.xlu0 %v343, 8
  %v345 = vpop.permute.xlu0 %344
  %vm346 = vcmask 130112
  %347 = vst.msk [vmem:[%s1] sm:$0xff] %vm346, %v345

// kernel: tile.19
$region0: #{tile.19}
  %s0 = inlined_call_operand.vmem [shape: f32[3,16,8], index: 0, kind: input, shape index: {}]
  %s1 = inlined_call_operand.vmem [shape: f32[3,128], index: 1, kind: output, shape index: {}]
  $region1: #{tile.19} parent=0
    #allocation0 [shape = 'u8[4096]{0}', space=vmem, size = 0x1000, scoped, tag = 'scoped mem for output reshape']
    %s2 = smov 3
    %v3 = vld [vmem:[%s0] ss:$16 sm:%s2]
    %s4 = scalar_lea.vmem %s0, 30
    %v5 = vld [vmem:[%s4] sm:$0x4]
    %vm6 = vcmask 1042434
    %v7 = vsel %vm6, %v5, %v3
    %vm8 = vcmask 64512
    %9 = vst.msk [vmem:[#allocation0] sm:$0x7] %vm8, %v7
    %s10 = scalar_lea.vmem %s0, 15
    %s11 = smov 3
    %v12 = vld [vmem:[%s10] ss:$16 sm:%s11]
    %s13 = scalar_lea.vmem %s0, 45
    %v14 = vld [vmem:[%s13] sm:$0x4]
    %vm15 = vcmask 1042434
    %v16 = vsel %vm15, %v14, %v12
    %17 = vrot.lane.b32.xlu0 %v16, 120
    %v18 = vpop.permute.xlu0 %17
    %vm19 = vcmask 1048512
    %20 = vst.msk [vmem:[#allocation0] sm:$0x7] %vm19, %v18
    %s21 = scalar_lea.vmem %s0, 14
    %s22 = smov 3
    %v23 = vld [vmem:[%s21] ss:$16 sm:%s22]
    %s24 = scalar_lea.vmem %s0, 44
    %v25 = vld [vmem:[%s24] sm:$0x4]
    %vm26 = vcmask 1042434
    %v27 = vsel %vm26, %v25, %v23
    %28 = vrot.lane.b32.xlu0 %v27, 112
    %v29 = vpop.permute.xlu0 %28
    %vm30 = vcmask 982912
    %31 = vst.msk [vmem:[#allocation0] sm:$0x7] %vm30, %v29
    %s32 = scalar_lea.vmem %s0, 13
    %s33 = smov 3
    %v34 = vld [vmem:[%s32] ss:$16 sm:%s33]
    %s35 = scalar_lea.vmem %s0, 43
    %v36 = vld [vmem:[%s35] sm:$0x4]
    %vm37 = vcmask 1042434
    %v38 = vsel %vm37, %v36, %v34
    %39 = vrot.lane.b32.xlu0 %v38, 104
    %v40 = vpop.permute.xlu0 %39
    %vm41 = vcmask 917312
    %42 = vst.msk [vmem:[#allocation0] sm:$0x7] %vm41, %v40
    %s43 = scalar_lea.vmem %s0, 12
    %s44 = smov 3
    %v45 = vld [vmem:[%s43] ss:$16 sm:%s44]
    %s46 = scalar_lea.vmem %s0, 42
    %v47 = vld [vmem:[%s46] sm:$0x4]
    %vm48 = vcmask 1042434
    %v49 = vsel %vm48, %v47, %v45
    %50 = vrot.lane.b32.xlu0 %v49, 96
    %v51 = vpop.permute.xlu0 %50
    %vm52 = vcmask 851712
    %53 = vst.msk [vmem:[#allocation0] sm:$0x7] %vm52, %v51
    %s54 = scalar_lea.vmem %s0, 11
    %s55 = smov 3
    %v56 = vld [vmem:[%s54] ss:$16 sm:%s55]
    %s57 = scalar_lea.vmem %s0, 41
    %v58 = vld [vmem:[%s57] sm:$0x4]
    %vm59 = vcmask 1042434
    %v60 = vsel %vm59, %v58, %v56
    %61 = vrot.lane.b32.xlu0 %v60, 88
    %v62 = vpop.permute.xlu0 %61
    %vm63 = vcmask 786112
    %64 = vst.msk [vmem:[#allocation0] sm:$0x7] %vm63, %v62
    %s65 = scalar_lea.vmem %s0, 10
    %s66 = smov 3
    %v67 = vld [vmem:[%s65] ss:$16 sm:%s66]
    %s68 = scalar_lea.vmem %s0, 40
    %v69 = vld [vmem:[%s68] sm:$0x4]
    %vm70 = vcmask 1042434
    %v71 = vsel %vm70, %v69, %v67
    %72 = vrot.lane.b32.xlu0 %v71, 80
    %v73 = vpop.permute.xlu0 %72
    %vm74 = vcmask 720512
    %75 = vst.msk [vmem:[#allocation0] sm:$0x7] %vm74, %v73
    %s76 = scalar_lea.vmem %s0, 9
    %s77 = smov 3
    %v78 = vld [vmem:[%s76] ss:$16 sm:%s77]
    %s79 = scalar_lea.vmem %s0, 39
    %v80 = vld [vmem:[%s79] sm:$0x4]
    %vm81 = vcmask 1042434
    %v82 = vsel %vm81, %v80, %v78
    %83 = vrot.lane.b32.xlu0 %v82, 72
    %v84 = vpop.permute.xlu0 %83
    %vm85 = vcmask 654912
    %86 = vst.msk [vmem:[#allocation0] sm:$0x7] %vm85, %v84
    %s87 = scalar_lea.vmem %s0, 8
    %s88 = smov 3
    %v89 = vld [vmem:[%s87] ss:$16 sm:%s88]
    %s90 = scalar_lea.vmem %s0, 38
    %v91 = vld [vmem:[%s90] sm:$0x4]
    %vm92 = vcmask 1042434
    %v93 = vsel %vm92, %v91, %v89
    %94 = vrot.lane.b32.xlu0 %v93, 64
    %v95 = vpop.permute.xlu0 %94
    %vm96 = vcmask 589312
    %97 = vst.msk [vmem:[#allocation0] sm:$0x7] %vm96, %v95
    %s98 = scalar_lea.vmem %s0, 7
    %s99 = smov 3
    %v100 = vld [vmem:[%s98] ss:$16 sm:%s99]
    %s101 = scalar_lea.vmem %s0, 37
    %v102 = vld [vmem:[%s101] sm:$0x4]
    %vm103 = vcmask 1042434
    %v104 = vsel %vm103, %v102, %v100
    %105 = vrot.lane.b32.xlu0 %v104, 56
    %v106 = vpop.permute.xlu0 %105
    %vm107 = vcmask 523712
    %108 = vst.msk [vmem:[#allocation0] sm:$0x7] %vm107, %v106
    %s109 = scalar_lea.vmem %s0, 6
    %s110 = smov 3
    %v111 = vld [vmem:[%s109] ss:$16 sm:%s110]
    %s112 = scalar_lea.vmem %s0, 36
    %v113 = vld [vmem:[%s112] sm:$0x4]
    %vm114 = vcmask 1042434
    %v115 = vsel %vm114, %v113, %v111
    %116 = vrot.lane.b32.xlu0 %v115, 48
    %v117 = vpop.permute.xlu0 %116
    %vm118 = vcmask 458112
    %119 = vst.msk [vmem:[#allocation0] sm:$0x7] %vm118, %v117
    %s120 = scalar_lea.vmem %s0, 5
    %s121 = smov 3
    %v122 = vld [vmem:[%s120] ss:$16 sm:%s121]
    %s123 = scalar_lea.vmem %s0, 35
    %v124 = vld [vmem:[%s123] sm:$0x4]
    %vm125 = vcmask 1042434
    %v126 = vsel %vm125, %v124, %v122
    %127 = vrot.lane.b32.xlu0 %v126, 40
    %v128 = vpop.permute.xlu0 %127
    %vm129 = vcmask 392512
    %130 = vst.msk [vmem:[#allocation0] sm:$0x7] %vm129, %v128
    %s131 = scalar_lea.vmem %s0, 4
    %s132 = smov 3
    %v133 = vld [vmem:[%s131] ss:$16 sm:%s132]
    %s134 = scalar_lea.vmem %s0, 34
    %v135 = vld [vmem:[%s134] sm:$0x4]
    %vm136 = vcmask 1042434
    %v137 = vsel %vm136, %v135, %v133
    %138 = vrot.lane.b32.xlu0 %v137, 32
    %v139 = vpop.permute.xlu0 %138
    %vm140 = vcmask 326912
    %141 = vst.msk [vmem:[#allocation0] sm:$0x7] %vm140, %v139
    %s142 = scalar_lea.vmem %s0, 3
    %s143 = smov 3
    %v144 = vld [vmem:[%s142] ss:$16 sm:%s143]
    %s145 = scalar_lea.vmem %s0, 33
    %v146 = vld [vmem:[%s145] sm:$0x4]
    %vm147 = vcmask 1042434
    %v148 = vsel %vm147, %v146, %v144
    %149 = vrot.lane.b32.xlu0 %v148, 24
    %v150 = vpop.permute.xlu0 %149
    %vm151 = vcmask 261312
    %152 = vst.msk [vmem:[#allocation0] sm:$0x7] %vm151, %v150
    %s153 = scalar_lea.vmem %s0, 2
    %s154 = smov 3
    %v155 = vld [vmem:[%s153] ss:$16 sm:%s154]
    %s156 = scalar_lea.vmem %s0, 32
    %v157 = vld [vmem:[%s156] sm:$0x4]
    %vm158 = vcmask 1042434
    %v159 = vsel %vm158, %v157, %v155
    %160 = vrot.lane.b32.xlu0 %v159, 16
    %v161 = vpop.permute.xlu0 %160
    %vm162 = vcmask 195712
    %163 = vst.msk [vmem:[#allocation0] sm:$0x7] %vm162, %v161
    %s164 = scalar_lea.vmem %s0, 1
    %s165 = smov 3
    %v166 = vld [vmem:[%s164] ss:$16 sm:%s165]
    %s167 = scalar_lea.vmem %s0, 31
    %v168 = vld [vmem:[%s167] sm:$0x4]
    %vm169 = vcmask 1042434
    %v170 = vsel %vm169, %v168, %v166
    %171 = vrot.lane.b32.xlu0 %v170, 8
    %v172 = vpop.permute.xlu0 %171
    %vm173 = vcmask 130112
    %174 = vst.msk [vmem:[#allocation0] sm:$0x7] %vm173, %v172
    %s176 = ssub.s32 16, 1
    %v177 = vld [vmem:[#allocation0] sm:%s176]
    %s179 = ssub.s32 16, 1
    %180 = vst [vmem:[%s1] sm:%s179] %v177

// kernel: resnet_forward.1
$region0: #{resnet_forward.1}
  #allocation0 [shape = 'u32[]', space=smem, size = 0x4, offset = 0x4, fixed_abs, tag = 'smem constant byte address 0x4 - core index']
  #allocation1 [shape = 'u32[72,128]{1,0:T(1,128)}', space=vmem, size = 0x9000, scoped, tag = 'internal scratch']
  #allocation2 [shape = 'bf16[40,64]{1,0:T(8,128)(2,1)}', space=vmem, size = 0x2800, scoped, tag = 'scratch operand']
  #allocation3 [shape = 'bf16[40,128]{1,0:T(8,128)(2,1)}', space=vmem, size = 0x2800, scoped, tag = 'scratch operand']
  %s0 = inlined_call_operand.vmem [shape: bf16[32,64], index: 0, kind: input, shape index: {}]
  %s1 = inlined_call_operand.vmem [shape: bf16[3,64,128], index: 1, kind: input, shape index: {}]
  %s2 = inlined_call_operand.vmem [shape: bf16[3,128,128], index: 2, kind: input, shape index: {}]
  %s3 = inlined_call_operand.vmem [shape: bf16[64,128], index: 3, kind: input, shape index: {}]
  %s4 = inlined_call_operand.vmem [shape: f32[8,128], index: 4, kind: input, shape index: {}]
  %s5 = inlined_call_operand.vmem [shape: f32[3,8], index: 5, kind: input, shape index: {}]
  %s6 = inlined_call_operand.vmem [shape: f32[3,128], index: 6, kind: input, shape index: {}]
  %s7 = inlined_call_operand.vmem [shape: f32[32,128], index: 7, kind: output, shape index: {}]
  %s8 = sld [smem:[#allocation0]]
  $region38: #{resnet_forward.1} parent=0
    _
  %s10 = ssub.s32 1, %s8
  %s11 = scalar_select 0, %s10, %s8
  // Predicated region
  $region2: #{resnet_forward.1} parent=0 // pred_check
    _
  $region3: #{resnet_forward.1} parent=0 // pred_check_branch
    %13 = sbr.rel (0) target = $region5
  $region4: #{resnet_forward.1} parent=0 // pred_region
    _
  $region5: #{resnet_forward.1} parent=0 // pred_fallthru
    _
  // Predicated region
  $region6: #{resnet_forward.1} parent=0 // pred_check
    _
  $region7: #{resnet_forward.1} parent=0 // pred_check_branch
    %15 = sbr.rel (0) target = $region9
  $region8: #{resnet_forward.1} parent=0 // pred_region
    _
  $region9: #{resnet_forward.1} parent=0 // pred_fallthru
    _
  // Predicated region
  $region10: #{resnet_forward.1} parent=0 // pred_check
    _
  $region11: #{resnet_forward.1} parent=0 // pred_check_branch
    %17 = sbr.rel (0) target = $region13
  $region12: #{resnet_forward.1} parent=0 // pred_region
    _
  $region13: #{resnet_forward.1} parent=0 // pred_fallthru
    _
  // Predicated region
  $region14: #{resnet_forward.1} parent=0 // pred_check
    _
  $region15: #{resnet_forward.1} parent=0 // pred_check_branch
    %19 = sbr.rel (0) target = $region17
  $region16: #{resnet_forward.1} parent=0 // pred_region
    _
  $region17: #{resnet_forward.1} parent=0 // pred_fallthru
    _
  // Predicated region
  $region18: #{resnet_forward.1} parent=0 // pred_check
    _
  $region19: #{resnet_forward.1} parent=0 // pred_check_branch
    %21 = sbr.rel (0) target = $region21
  $region20: #{resnet_forward.1} parent=0 // pred_region
    _
  $region21: #{resnet_forward.1} parent=0 // pred_fallthru
    _
  // Predicated region
  $region22: #{resnet_forward.1} parent=0 // pred_check
    _
  $region23: #{resnet_forward.1} parent=0 // pred_check_branch
    %23 = sbr.rel (0) target = $region25
  $region24: #{resnet_forward.1} parent=0 // pred_region
    _
  $region25: #{resnet_forward.1} parent=0 // pred_fallthru
    _
  // Predicated region
  $region26: #{resnet_forward.1} parent=0 // pred_check
    _
  $region27: #{resnet_forward.1} parent=0 // pred_check_branch
    %25 = sbr.rel (0) target = $region29
  $region28: #{resnet_forward.1} parent=0 // pred_region
    _
  $region29: #{resnet_forward.1} parent=0 // pred_fallthru
    _
  %v27 = vld [vmem:[%s4] sm:$0xff]
  %v28 = vld [vmem:[%s0] sm:$0xf]
  %v29 = vld [vmem:[%s0 + $0x4] sm:$0xf]
  %v30 = vld [vmem:[%s0 + $0x8] sm:$0xf]
  %v31 = vld [vmem:[%s0 + $0xc] sm:$0xf]
  %vm32 = vcmask 517120
  %33 = vst.msk [vmem:[#allocation2] sm:$0x3] %vm32, 0
  %vm34 = vcmask 519170
  %35 = vst.msk [vmem:[#allocation2 + $0x10] sm:$0xc] %vm34, 0
  %vm40 = vcmask 1041408
  %vm41 = vcmask 1045508
  %vm42 = vmor %vm40, %vm41
  %v43 = vrot.slane %v28, 6
  %v44 = vrot.slane %v43, 4
  %v45 = vrot.slane %v29, 6
  %v46 = vsel %vm42, %v44, %v45
  %v47 = vrot.slane %v45, 4
  %v48 = vrot.slane %v30, 6
  %v49 = vsel %vm42, %v47, %v48
  %v50 = vrot.slane %v48, 4
  %v51 = vrot.slane %v31, 6
  %v52 = vsel %vm42, %v50, %v51
  %v53 = vrot.slane %v51, 4
  %59 = vst.msk [vmem:[#allocation2] sm:$0xc] %vm34, %v43
  %vm60 = vcmask 519168
  %61 = vst.msk [vmem:[#allocation2 + $0x4] sm:$0xf] %vm60, %v46
  %62 = vst.msk [vmem:[#allocation2 + $0x8] sm:$0xf] %vm60, %v49
  %63 = vst.msk [vmem:[#allocation2 + $0xc] sm:$0xf] %vm60, %v52
  %64 = vst.msk [vmem:[#allocation2 + $0x10] sm:$0x3] %vm32, %v53
  %v65 = vld [vmem:[#allocation2] sm:$0xf]
  %v66 = vld [vmem:[#allocation2 + $0x4] sm:$0xf]
  %v67 = vld [vmem:[#allocation2 + $0x8] sm:$0xf]
  %v68 = vld [vmem:[#allocation2 + $0xc] sm:$0xf]
  %v69 = vld [vmem:[%s1] sm:$0xf]
  %v70 = vld [vmem:[%s1 + $0x4] sm:$0xf]
  %v71 = vld [vmem:[%s1 + $0x8] sm:$0xf]
  %v72 = vld [vmem:[%s1 + $0xc] sm:$0xf]
  %v73 = vld [vmem:[%s1 + $0x10] sm:$0xf]
  %v74 = vld [vmem:[%s1 + $0x14] sm:$0xf]
  %v75 = vld [vmem:[%s1 + $0x18] sm:$0xf]
  %v76 = vld [vmem:[%s1 + $0x1c] sm:$0xf]
  %v77 = vld [vmem:[#allocation2] sm:$0xc]
  %v78 = vld [vmem:[#allocation2 + $0x10] sm:$0x3]
  %s79 = scalar_lea.vmem %s1, 32
  %v80 = vld [vmem:[%s79] sm:$0xf]
  %v81 = vld [vmem:[%s79 + $0x4] sm:$0xf]
  %v82 = vld [vmem:[%s79 + $0x8] sm:$0xf]
  %v83 = vld [vmem:[%s79 + $0xc] sm:$0xf]
  %v84 = vld [vmem:[%s79 + $0x10] sm:$0xf]
  %v85 = vld [vmem:[%s79 + $0x14] sm:$0xf]
  %v86 = vld [vmem:[%s79 + $0x18] sm:$0xf]
  %v87 = vld [vmem:[%s79 + $0x1c] sm:$0xf]
  %v93 = vunpack.c.l.b16 %v77
  %v94 = vunpack.c.l.b16 %v66
  %v95 = vunpack.c.l.b16 %v67
  %v96 = vunpack.c.l.b16 %v68
  %v97 = vunpack.c.l.b16 %v78
  %v98 = vpack.c.b16 %v94, %v93
  %v99 = vpack.c.b16 %v96, %v95
  %v100 = vpack.c.b16 %v97, %v97
  %vm101 = vcmask 1045504
  %v102 = vrot.slane %v98, 2
  %v103 = vrot.slane %v99, 2
  %v104 = vsel %vm101, %v102, %v103
  %v105 = vrot.slane %v100, 2
  %v106 = vsel %vm101, %v103, %v105
  %v115 = vunpack.c.l.b16 %v80
  %v116 = vunpack.c.l.b16 %v81
  %v117 = vunpack.c.l.b16 %v82
  %v118 = vunpack.c.l.b16 %v83
  %v119 = vunpack.c.l.b16 %v84
  %v120 = vunpack.c.l.b16 %v85
  %v121 = vunpack.c.l.b16 %v86
  %v122 = vunpack.c.l.b16 %v87
  %v123 = vpack.c.b16 %v116, %v115
  %v124 = vpack.c.b16 %v118, %v117
  %v125 = vpack.c.b16 %v120, %v119
  %v126 = vpack.c.b16 %v122, %v121
  %vm131 = vcmask 523264
  %v133 = vsel %vm131, %v104, 0
  %v136 = vsel %vm131, %v106, 0
  %138 = vmatpush.bf16.msra.mxu0 0
  %139 = vmatpush.bf16.msra.mxu0 0
  %140 = vmatpush.bf16.msra.mxu0 0
  %141 = vmatpush.bf16.msra.mxu0 0
  %142 = vmatpush.bf16.msra.mxu0 %v126
  %143 = vmatpush.bf16.msra.mxu0 %v125
  %144 = vmatpush.bf16.msra.mxu0 %v124
  %145 = vmatpush.bf16.msra.mxu0 %v123
  %146 = vmatmul.bf16.gmra.mxu0 %v133
  %v147 = vpop.f32.mrf.mxu0
  %v148 = vadd.f32 0.0, %v147
  %v149 = vpop.f32.mrf.mxu0
  %v150 = vadd.f32 0.0, %v149
  %151 = vmatmul.bf16.gmra.mxu0 %v136
  %v152 = vpop.f32.mrf.mxu0
  %v153 = vadd.f32 0.0, %v152
  %v154 = vpop.f32.mrf.mxu0
  %v155 = vadd.f32 0.0, %v154
  %156 = vdwg.mxu0
  %v158 = vunpack.c.l.b16 %v65
  %v159 = vpack.c.b16 %v94, %v158
  %v168 = vunpack.c.l.b16 %v69
  %v169 = vunpack.c.l.b16 %v70
  %v170 = vunpack.c.l.b16 %v71
  %v171 = vunpack.c.l.b16 %v72
  %v172 = vunpack.c.l.b16 %v73
  %v173 = vunpack.c.l.b16 %v74
  %v174 = vunpack.c.l.b16 %v75
  %v175 = vunpack.c.l.b16 %v76
  %v176 = vpack.c.b16 %v169, %v168
  %v177 = vpack.c.b16 %v171, %v170
  %v178 = vpack.c.b16 %v173, %v172
  %v179 = vpack.c.b16 %v175, %v174
  %v185 = vsel %vm131, %v159, 0
  %v188 = vsel %vm131, %v99, 0
  %190 = vmatpush.bf16.msra.mxu0 0
  %191 = vmatpush.bf16.msra.mxu0 0
  %192 = vmatpush.bf16.msra.mxu0 0
  %193 = vmatpush.bf16.msra.mxu0 0
  %194 = vmatpush.bf16.msra.mxu0 %v179
  %195 = vmatpush.bf16.msra.mxu0 %v178
  %196 = vmatpush.bf16.msra.mxu0 %v177
  %197 = vmatpush.bf16.msra.mxu0 %v176
  %198 = vmatmul.bf16.gmra.mxu0 %v185
  %v199 = vpop.f32.mrf.mxu0
  %v200 = vadd.f32 %v148, %v199
  %v201 = vpop.f32.mrf.mxu0
  %v202 = vadd.f32 %v150, %v201
  %203 = vmatmul.bf16.gmra.mxu0 %v188
  %v204 = vpop.f32.mrf.mxu0
  %v205 = vadd.f32 %v153, %v204
  %v206 = vpop.f32.mrf.mxu0
  %v207 = vadd.f32 %v155, %v206
  %208 = vdwg.mxu0
  %v209 = vld [vmem:[#allocation2 + $0x10] sm:$0xf]
  %s210 = scalar_lea.vmem %s1, 64
  %v211 = vld [vmem:[%s210] sm:$0xf]
  %v212 = vld [vmem:[%s210 + $0x4] sm:$0xf]
  %v213 = vld [vmem:[%s210 + $0x8] sm:$0xf]
  %v214 = vld [vmem:[%s210 + $0xc] sm:$0xf]
  %v215 = vld [vmem:[%s210 + $0x10] sm:$0xf]
  %v216 = vld [vmem:[%s210 + $0x14] sm:$0xf]
  %v217 = vld [vmem:[%s210 + $0x18] sm:$0xf]
  %v218 = vld [vmem:[%s210 + $0x1c] sm:$0xf]
  %v220 = vunpack.c.l.b16 %v209
  %v221 = vpack.c.b16 %v95, %v94
  %v222 = vpack.c.b16 %v220, %v96
  %v231 = vunpack.c.l.b16 %v211
  %v232 = vunpack.c.l.b16 %v212
  %v233 = vunpack.c.l.b16 %v213
  %v234 = vunpack.c.l.b16 %v214
  %v235 = vunpack.c.l.b16 %v215
  %v236 = vunpack.c.l.b16 %v216
  %v237 = vunpack.c.l.b16 %v217
  %v238 = vunpack.c.l.b16 %v218
  %v239 = vpack.c.b16 %v232, %v231
  %v240 = vpack.c.b16 %v234, %v233
  %v241 = vpack.c.b16 %v236, %v235
  %v242 = vpack.c.b16 %v238, %v237
  %v248 = vsel %vm131, %v221, 0
  %v251 = vsel %vm131, %v222, 0
  %253 = vmatpush.bf16.msra.mxu0 0
  %254 = vmatpush.bf16.msra.mxu0 0
  %255 = vmatpush.bf16.msra.mxu0 0
  %256 = vmatpush.bf16.msra.mxu0 0
  %257 = vmatpush.bf16.msra.mxu0 %v242
  %258 = vmatpush.bf16.msra.mxu0 %v241
  %259 = vmatpush.bf16.msra.mxu0 %v240
  %260 = vmatpush.bf16.msra.mxu0 %v239
  %261 = vmatmul.bf16.gmra.mxu0 %v248
  %v262 = vpop.f32.mrf.mxu0
  %v263 = vadd.f32 0.0, %v262
  %v264 = vpop.f32.mrf.mxu0
  %v265 = vadd.f32 0.0, %v264
  %266 = vmatmul.bf16.gmra.mxu0 %v251
  %v267 = vpop.f32.mrf.mxu0
  %v268 = vadd.f32 0.0, %v267
  %v269 = vpop.f32.mrf.mxu0
  %v270 = vadd.f32 0.0, %v269
  %271 = vdwg.mxu0
  %v272 = vadd.f32 %v200, %v263
  %v273 = vadd.f32 %v202, %v265
  %v274 = vadd.f32 %v205, %v268
  %v275 = vadd.f32 %v207, %v270
  %v276 = vld [vmem:[%s5] sm:$0x1]
  %v277 = vld [vmem:[%s6] sm:$0x1]
  %v278 = vadd.f32 %v272, %v273
  %v279 = vadd.f32 %v278, %v274
  %v280 = vadd.f32 %v279, %v275
  %v281 = vrot.slane %v280, 4
  %v282 = vadd.f32 %v280, %v281
  %v283 = vrot.slane %v282, 2
  %v284 = vadd.f32 %v282, %v283
  %v285 = vrot.slane %v284, 1
  %v286 = vadd.f32 %v284, %v285
  %287 = vmatpush.xpose.msra.mxu0 0.0
  %288 = vmatpush.xpose.msra.mxu0 0.0
  %289 = vmatpush.xpose.msra.mxu0 0.0
  %290 = vmatpush.xpose.msra.mxu0 0.0
  %291 = vmatpush.xpose.msra.mxu0 0.0
  %292 = vmatpush.xpose.msra.mxu0 0.0
  %293 = vmatpush.xpose.msra.mxu0 0.0
  %294 = vmatpush.xpose.msra.mxu0 0.0
  %295 = vmatpush.xpose.msra.mxu0 0.0
  %296 = vmatpush.xpose.msra.mxu0 0.0
  %297 = vmatpush.xpose.msra.mxu0 0.0
  %298 = vmatpush.xpose.msra.mxu0 0.0
  %299 = vmatpush.xpose.msra.mxu0 0.0
  %300 = vmatpush.xpose.msra.mxu0 0.0
  %301 = vmatpush.xpose.msra.mxu0 0.0
  %302 = vmatpush.xpose.msra.mxu0 %v27
  %303 = vmatmul.f32.gmra.mxu0 %v286
  %v304 = vpop.f32.mrf.mxu0
  %v305 = vadd.f32 0.0, %v304
  %306 = vdwg.mxu0
  %v307 = vrcp.pop 512.0
  %v308 = vmul.f32 512.0, %v307
  %v309 = vsub.f32 1.0, %v308
  %v310 = vmul.f32 %v307, %v309
  %v311 = vadd.f32 %v307, %v310
  %vm312 = vweird.f32 %v307
  %v313 = vsel %vm312, %v307, %v311
  %v314 = vmul.f32 %v305, %v313
  %vm315 = vcmask 64512
  %v317 = vsel %vm315, %v314, 0
  %319 = vmatpush.msra.mxu0 0.0
  %320 = vmatpush.msra.mxu0 0.0
  %321 = vmatpush.msra.mxu0 0.0
  %322 = vmatpush.msra.mxu0 0.0
  %323 = vmatpush.msra.mxu0 0.0
  %324 = vmatpush.msra.mxu0 0.0
  %325 = vmatpush.msra.mxu0 0.0
  %326 = vmatpush.msra.mxu0 0.0
  %327 = vmatpush.msra.mxu0 0.0
  %328 = vmatpush.msra.mxu0 0.0
  %329 = vmatpush.msra.mxu0 0.0
  %330 = vmatpush.msra.mxu0 0.0
  %331 = vmatpush.msra.mxu0 0.0
  %332 = vmatpush.msra.mxu0 0.0
  %333 = vmatpush.msra.mxu0 0.0
  %334 = vmatpush.msra.mxu0 %v27
  %335 = vmatmul.f32.gmra.mxu0 %v317
  %v336 = vpop.f32.mrf.mxu0
  %v337 = vadd.f32 0.0, %v336
  %338 = vdwg.mxu0
  %v339 = vperm.slane %v337, 0
  %v340 = vsub.f32 %v272, %v339
  %v341 = vsub.f32 %v273, %v339
  %v342 = vsub.f32 %v274, %v339
  %v343 = vsub.f32 %v275, %v339
  %v344 = vmul.f32 %v340, %v340
  %v345 = vmul.f32 %v341, %v341
  %v346 = vmul.f32 %v342, %v342
  %v347 = vmul.f32 %v343, %v343
  %v348 = vadd.f32 %v344, %v345
  %v349 = vadd.f32 %v348, %v346
  %v350 = vadd.f32 %v349, %v347
  %v351 = vrot.slane %v350, 4
  %v352 = vadd.f32 %v350, %v351
  %v353 = vrot.slane %v352, 2
  %v354 = vadd.f32 %v352, %v353
  %v355 = vrot.slane %v354, 1
  %v356 = vadd.f32 %v354, %v355
  %357 = vmatpush.xpose.msra.mxu0 0.0
  %358 = vmatpush.xpose.msra.mxu0 0.0
  %359 = vmatpush.xpose.msra.mxu0 0.0
  %360 = vmatpush.xpose.msra.mxu0 0.0
  %361 = vmatpush.xpose.msra.mxu0 0.0
  %362 = vmatpush.xpose.msra.mxu0 0.0
  %363 = vmatpush.xpose.msra.mxu0 0.0
  %364 = vmatpush.xpose.msra.mxu0 0.0
  %365 = vmatpush.xpose.msra.mxu0 0.0
  %366 = vmatpush.xpose.msra.mxu0 0.0
  %367 = vmatpush.xpose.msra.mxu0 0.0
  %368 = vmatpush.xpose.msra.mxu0 0.0
  %369 = vmatpush.xpose.msra.mxu0 0.0
  %370 = vmatpush.xpose.msra.mxu0 0.0
  %371 = vmatpush.xpose.msra.mxu0 0.0
  %372 = vmatpush.xpose.msra.mxu0 %v27
  %373 = vmatmul.f32.gmra.mxu0 %v356
  %v374 = vpop.f32.mrf.mxu0
  %v375 = vadd.f32 0.0, %v374
  %376 = vdwg.mxu0
  %v377 = vmul.f32 %v375, %v313
  %v378 = vadd.f32 %v377, 1e-05
  %v379 = vrsqrt.pop %v378
  %v380 = vmul.f32 %v379, %v378
  %v381 = vmul.f32 %v380, %v379
  %v382 = vmul.f32 0.5, %v381
  %v383 = vsub.f32 1.5, %v382
  %v384 = vmul.f32 %v379, %v383
  %vm385 = vweird.f32 %v378
  %vm386 = vweird.f32 %v379
  %vm387 = vmor %vm385, %vm386
  %v388 = vsel %vm387, %v379, %v384
  %v389 = vmul.f32 %v276, %v388
  %v391 = vsel %vm315, %v389, 0
  %393 = vmatpush.msra.mxu0 0.0
  %394 = vmatpush.msra.mxu0 0.0
  %395 = vmatpush.msra.mxu0 0.0
  %396 = vmatpush.msra.mxu0 0.0
  %397 = vmatpush.msra.mxu0 0.0
  %398 = vmatpush.msra.mxu0 0.0
  %399 = vmatpush.msra.mxu0 0.0
  %400 = vmatpush.msra.mxu0 0.0
  %401 = vmatpush.msra.mxu0 0.0
  %402 = vmatpush.msra.mxu0 0.0
  %403 = vmatpush.msra.mxu0 0.0
  %404 = vmatpush.msra.mxu0 0.0
  %405 = vmatpush.msra.mxu0 0.0
  %406 = vmatpush.msra.mxu0 0.0
  %407 = vmatpush.msra.mxu0 0.0
  %408 = vmatpush.msra.mxu0 %v27
  %409 = vmatmul.f32.gmra.mxu0 %v391
  %v410 = vpop.f32.mrf.mxu0
  %v411 = vadd.f32 0.0, %v410
  %412 = vdwg.mxu0
  %v413 = vperm.slane %v411, 0
  %v414 = vmul.f32 %v340, %v413
  %v415 = vmul.f32 %v341, %v413
  %v416 = vmul.f32 %v342, %v413
  %v417 = vmul.f32 %v343, %v413
  %v418 = vperm.slane %v277, 0
  %v419 = vadd.f32 %v414, %v418
  %v420 = vadd.f32 %v415, %v418
  %v421 = vadd.f32 %v416, %v418
  %v422 = vadd.f32 %v417, %v418
  %v423 = vmax.f32 %v419, 0.0
  %v424 = vmax.f32 %v420, 0.0
  %v425 = vmax.f32 %v421, 0.0
  %v426 = vmax.f32 %v422, 0.0
  %427 = vst [vmem:[#allocation3] sm:$0x1] 0
  %428 = vst [vmem:[#allocation3 + $0x10] sm:$0xe] 0
  %v429 = vpack.c.bf16 %v423, %v423
  %v430 = vpack.c.bf16 %v424, %v424
  %v431 = vpack.c.bf16 %v425, %v425
  %v432 = vpack.c.bf16 %v426, %v426
  %vm437 = vcmask 1040384
  %vm438 = vcmask 1044484
  %vm439 = vmor %vm437, %vm438
  %v440 = vrot.slane %v429, 7
  %v441 = vrot.slane %v440, 4
  %v442 = vrot.slane %v430, 7
  %v443 = vsel %vm439, %v441, %v442
  %v444 = vrot.slane %v442, 4
  %v445 = vrot.slane %v431, 7
  %v446 = vsel %vm439, %v444, %v445
  %v447 = vrot.slane %v445, 4
  %v448 = vrot.slane %v432, 7
  %v449 = vsel %vm439, %v447, %v448
  %v450 = vrot.slane %v448, 4
  %456 = vst [vmem:[#allocation3] sm:$0xe] %v440
  %457 = vst [vmem:[#allocation3 + $0x4] sm:$0xf] %v443
  %458 = vst [vmem:[#allocation3 + $0x8] sm:$0xf] %v446
  %459 = vst [vmem:[#allocation3 + $0xc] sm:$0xf] %v449
  %460 = vst [vmem:[#allocation3 + $0x10] sm:$0x1] %v450
  %v461 = vld [vmem:[#allocation3] sm:$0xf]
  %v462 = vld [vmem:[#allocation3 + $0x4] sm:$0xf]
  %v463 = vld [vmem:[#allocation3 + $0x8] sm:$0xf]
  %v464 = vld [vmem:[#allocation3 + $0xc] sm:$0xf]
  %v465 = vld [vmem:[%s2] sm:$0xf]
  %v466 = vld [vmem:[%s2 + $0x4] sm:$0xf]
  %v467 = vld [vmem:[%s2 + $0x8] sm:$0xf]
  %v468 = vld [vmem:[%s2 + $0xc] sm:$0xf]
  %v469 = vld [vmem:[%s2 + $0x10] sm:$0xf]
  %v470 = vld [vmem:[%s2 + $0x14] sm:$0xf]
  %v471 = vld [vmem:[%s2 + $0x18] sm:$0xf]
  %v472 = vld [vmem:[%s2 + $0x1c] sm:$0xf]
  %v473 = vld [vmem:[%s2 + $0x20] sm:$0xf]
  %v474 = vld [vmem:[%s2 + $0x24] sm:$0xf]
  %v475 = vld [vmem:[%s2 + $0x28] sm:$0xf]
  %v476 = vld [vmem:[%s2 + $0x2c] sm:$0xf]
  %v477 = vld [vmem:[%s2 + $0x30] sm:$0xf]
  %v478 = vld [vmem:[%s2 + $0x34] sm:$0xf]
  %v479 = vld [vmem:[%s2 + $0x38] sm:$0xf]
  %v480 = vld [vmem:[%s2 + $0x3c] sm:$0xf]
  %v481 = vld [vmem:[#allocation3] sm:$0xe]
  %v482 = vld [vmem:[#allocation3 + $0x4] sm:$0xf]
  %v483 = vld [vmem:[#allocation3 + $0x8] sm:$0xf]
  %v484 = vld [vmem:[#allocation3 + $0xc] sm:$0xf]
  %v485 = vld [vmem:[#allocation3 + $0x10] sm:$0x1]
  %s486 = scalar_lea.vmem %s2, 64
  %v487 = vld [vmem:[%s486] sm:$0xf]
  %v488 = vld [vmem:[%s486 + $0x4] sm:$0xf]
  %v489 = vld [vmem:[%s486 + $0x8] sm:$0xf]
  %v490 = vld [vmem:[%s486 + $0xc] sm:$0xf]
  %v491 = vld [vmem:[%s486 + $0x10] sm:$0xf]
  %v492 = vld [vmem:[%s486 + $0x14] sm:$0xf]
  %v493 = vld [vmem:[%s486 + $0x18] sm:$0xf]
  %v494 = vld [vmem:[%s486 + $0x1c] sm:$0xf]
  %v495 = vld [vmem:[%s486 + $0x20] sm:$0xf]
  %v496 = vld [vmem:[%s486 + $0x24] sm:$0xf]
  %v497 = vld [vmem:[%s486 + $0x28] sm:$0xf]
  %v498 = vld [vmem:[%s486 + $0x2c] sm:$0xf]
  %v499 = vld [vmem:[%s486 + $0x30] sm:$0xf]
  %v500 = vld [vmem:[%s486 + $0x34] sm:$0xf]
  %v501 = vld [vmem:[%s486 + $0x38] sm:$0xf]
  %v502 = vld [vmem:[%s486 + $0x3c] sm:$0xf]
  %v508 = vunpack.c.l.b16 %v481
  %v509 = vunpack.c.l.b16 %v482
  %v510 = vunpack.c.l.b16 %v483
  %v511 = vunpack.c.l.b16 %v484
  %v512 = vunpack.c.l.b16 %v485
  %v513 = vpack.c.b16 %v509, %v508
  %v514 = vpack.c.b16 %v511, %v510
  %v515 = vpack.c.b16 %v512, %v512
  %vm516 = vcmask 1046528
  %v517 = vrot.slane %v513, 1
  %v518 = vrot.slane %v514, 1
  %v519 = vsel %vm516, %v517, %v518
  %v520 = vrot.slane %v515, 1
  %v521 = vsel %vm516, %v518, %v520
  %v540 = vunpack.c.l.b16 %v487
  %v541 = vunpack.c.l.b16 %v488
  %v542 = vunpack.c.l.b16 %v489
  %v543 = vunpack.c.l.b16 %v490
  %v544 = vunpack.c.l.b16 %v491
  %v545 = vunpack.c.l.b16 %v492
  %v546 = vunpack.c.l.b16 %v493
  %v547 = vunpack.c.l.b16 %v494
  %v548 = vunpack.c.l.b16 %v495
  %v549 = vunpack.c.l.b16 %v496
  %v550 = vunpack.c.l.b16 %v497
  %v551 = vunpack.c.l.b16 %v498
  %v552 = vunpack.c.l.b16 %v499
  %v553 = vunpack.c.l.b16 %v500
  %v554 = vunpack.c.l.b16 %v501
  %v555 = vunpack.c.l.b16 %v502
  %v556 = vpack.c.b16 %v541, %v540
  %v557 = vpack.c.b16 %v543, %v542
  %v558 = vpack.c.b16 %v545, %v544
  %v559 = vpack.c.b16 %v547, %v546
  %v560 = vpack.c.b16 %v549, %v548
  %v561 = vpack.c.b16 %v551, %v550
  %v562 = vpack.c.b16 %v553, %v552
  %v563 = vpack.c.b16 %v555, %v554
  %572 = vmatpush.bf16.msra.mxu0 %v563
  %573 = vmatpush.bf16.msra.mxu0 %v562
  %574 = vmatpush.bf16.msra.mxu0 %v561
  %575 = vmatpush.bf16.msra.mxu0 %v560
  %576 = vmatpush.bf16.msra.mxu0 %v559
  %577 = vmatpush.bf16.msra.mxu0 %v558
  %578 = vmatpush.bf16.msra.mxu0 %v557
  %579 = vmatpush.bf16.msra.mxu0 %v556
  %580 = vmatmul.bf16.gmra.mxu0 %v519
  %v581 = vpop.f32.mrf.mxu0
  %v582 = vadd.f32 0.0, %v581
  %v583 = vpop.f32.mrf.mxu0
  %v584 = vadd.f32 0.0, %v583
  %585 = vmatmul.bf16.gmra.mxu0 %v521
  %v586 = vpop.f32.mrf.mxu0
  %v587 = vadd.f32 0.0, %v586
  %v588 = vpop.f32.mrf.mxu0
  %v589 = vadd.f32 0.0, %v588
  %590 = vdwg.mxu0
  %v595 = vunpack.c.l.b16 %v461
  %v596 = vunpack.c.l.b16 %v462
  %v597 = vunpack.c.l.b16 %v463
  %v598 = vunpack.c.l.b16 %v464
  %v599 = vpack.c.b16 %v596, %v595
  %v600 = vpack.c.b16 %v598, %v597
  %v619 = vunpack.c.l.b16 %v465
  %v620 = vunpack.c.l.b16 %v466
  %v621 = vunpack.c.l.b16 %v467
  %v622 = vunpack.c.l.b16 %v468
  %v623 = vunpack.c.l.b16 %v469
  %v624 = vunpack.c.l.b16 %v470
  %v625 = vunpack.c.l.b16 %v471
  %v626 = vunpack.c.l.b16 %v472
  %v627 = vunpack.c.l.b16 %v473
  %v628 = vunpack.c.l.b16 %v474
  %v629 = vunpack.c.l.b16 %v475
  %v630 = vunpack.c.l.b16 %v476
  %v631 = vunpack.c.l.b16 %v477
  %v632 = vunpack.c.l.b16 %v478
  %v633 = vunpack.c.l.b16 %v479
  %v634 = vunpack.c.l.b16 %v480
  %v635 = vpack.c.b16 %v620, %v619
  %v636 = vpack.c.b16 %v622, %v621
  %v637 = vpack.c.b16 %v624, %v623
  %v638 = vpack.c.b16 %v626, %v625
  %v639 = vpack.c.b16 %v628, %v627
  %v640 = vpack.c.b16 %v630, %v629
  %v641 = vpack.c.b16 %v632, %v631
  %v642 = vpack.c.b16 %v634, %v633
  %651 = vmatpush.bf16.msra.mxu0 %v642
  %652 = vmatpush.bf16.msra.mxu0 %v641
  %653 = vmatpush.bf16.msra.mxu0 %v640
  %654 = vmatpush.bf16.msra.mxu0 %v639
  %655 = vmatpush.bf16.msra.mxu0 %v638
  %656 = vmatpush.bf16.msra.mxu0 %v637
  %657 = vmatpush.bf16.msra.mxu0 %v636
  %658 = vmatpush.bf16.msra.mxu0 %v635
  %659 = vmatmul.bf16.gmra.mxu0 %v599
  %v660 = vpop.f32.mrf.mxu0
  %v661 = vadd.f32 %v582, %v660
  %v662 = vpop.f32.mrf.mxu0
  %v663 = vadd.f32 %v584, %v662
  %664 = vmatmul.bf16.gmra.mxu0 %v600
  %v665 = vpop.f32.mrf.mxu0
  %v666 = vadd.f32 %v587, %v665
  %v667 = vpop.f32.mrf.mxu0
  %v668 = vadd.f32 %v589, %v667
  %669 = vdwg.mxu0
  %v670 = vld [vmem:[#allocation3] sm:$0xc]
  %v671 = vld [vmem:[#allocation3 + $0x10] sm:$0x3]
  %s672 = scalar_lea.vmem %s2, 128
  %v673 = vld [vmem:[%s672] sm:$0xf]
  %v674 = vld [vmem:[%s672 + $0x4] sm:$0xf]
  %v675 = vld [vmem:[%s672 + $0x8] sm:$0xf]
  %v676 = vld [vmem:[%s672 + $0xc] sm:$0xf]
  %v677 = vld [vmem:[%s672 + $0x10] sm:$0xf]
  %v678 = vld [vmem:[%s672 + $0x14] sm:$0xf]
  %v679 = vld [vmem:[%s672 + $0x18] sm:$0xf]
  %v680 = vld [vmem:[%s672 + $0x1c] sm:$0xf]
  %v681 = vld [vmem:[%s672 + $0x20] sm:$0xf]
  %v682 = vld [vmem:[%s672 + $0x24] sm:$0xf]
  %v683 = vld [vmem:[%s672 + $0x28] sm:$0xf]
  %v684 = vld [vmem:[%s672 + $0x2c] sm:$0xf]
  %v685 = vld [vmem:[%s672 + $0x30] sm:$0xf]
  %v686 = vld [vmem:[%s672 + $0x34] sm:$0xf]
  %v687 = vld [vmem:[%s672 + $0x38] sm:$0xf]
  %v688 = vld [vmem:[%s672 + $0x3c] sm:$0xf]
  %v691 = vunpack.c.l.b16 %v670
  %v692 = vunpack.c.l.b16 %v671
  %v693 = vpack.c.b16 %v509, %v691
  %v694 = vpack.c.b16 %v692, %v692
  %v695 = vrot.slane %v693, 2
  %v696 = vrot.slane %v514, 2
  %v697 = vsel %vm101, %v695, %v696
  %v698 = vrot.slane %v694, 2
  %v699 = vsel %vm101, %v696, %v698
  %v718 = vunpack.c.l.b16 %v673
  %v719 = vunpack.c.l.b16 %v674
  %v720 = vunpack.c.l.b16 %v675
  %v721 = vunpack.c.l.b16 %v676
  %v722 = vunpack.c.l.b16 %v677
  %v723 = vunpack.c.l.b16 %v678
  %v724 = vunpack.c.l.b16 %v679
  %v725 = vunpack.c.l.b16 %v680
  %v726 = vunpack.c.l.b16 %v681
  %v727 = vunpack.c.l.b16 %v682
  %v728 = vunpack.c.l.b16 %v683
  %v729 = vunpack.c.l.b16 %v684
  %v730 = vunpack.c.l.b16 %v685
  %v731 = vunpack.c.l.b16 %v686
  %v732 = vunpack.c.l.b16 %v687
  %v733 = vunpack.c.l.b16 %v688
  %v734 = vpack.c.b16 %v719, %v718
  %v735 = vpack.c.b16 %v721, %v720
  %v736 = vpack.c.b16 %v723, %v722
  %v737 = vpack.c.b16 %v725, %v724
  %v738 = vpack.c.b16 %v727, %v726
  %v739 = vpack.c.b16 %v729, %v728
  %v740 = vpack.c.b16 %v731, %v730
  %v741 = vpack.c.b16 %v733, %v732
  %750 = vmatpush.bf16.msra.mxu0 %v741
  %751 = vmatpush.bf16.msra.mxu0 %v740
  %752 = vmatpush.bf16.msra.mxu0 %v739
  %753 = vmatpush.bf16.msra.mxu0 %v738
  %754 = vmatpush.bf16.msra.mxu0 %v737
  %755 = vmatpush.bf16.msra.mxu0 %v736
  %756 = vmatpush.bf16.msra.mxu0 %v735
  %757 = vmatpush.bf16.msra.mxu0 %v734
  %758 = vmatmul.bf16.gmra.mxu0 %v697
  %v759 = vpop.f32.mrf.mxu0
  %v760 = vadd.f32 0.0, %v759
  %v761 = vpop.f32.mrf.mxu0
  %v762 = vadd.f32 0.0, %v761
  %763 = vmatmul.bf16.gmra.mxu0 %v699
  %v764 = vpop.f32.mrf.mxu0
  %v765 = vadd.f32 0.0, %v764
  %v766 = vpop.f32.mrf.mxu0
  %v767 = vadd.f32 0.0, %v766
  %768 = vdwg.mxu0
  %v769 = vadd.f32 %v661, %v760
  %v770 = vadd.f32 %v663, %v762
  %v771 = vadd.f32 %v666, %v765
  %v772 = vadd.f32 %v668, %v767
  %v773 = vld [vmem:[%s5 + $0x1] sm:$0x1]
  %v774 = vld [vmem:[%s6 + $0x1] sm:$0x1]
  %v775 = vadd.f32 %v769, %v770
  %v776 = vadd.f32 %v775, %v771
  %v777 = vadd.f32 %v776, %v772
  %v778 = vrot.slane %v777, 4
  %v779 = vadd.f32 %v777, %v778
  %v780 = vrot.slane %v779, 2
  %v781 = vadd.f32 %v779, %v780
  %v782 = vrot.slane %v781, 1
  %v783 = vadd.f32 %v781, %v782
  %784 = vmatpush.xpose.msra.mxu0 0.0
  %785 = vmatpush.xpose.msra.mxu0 0.0
  %786 = vmatpush.xpose.msra.mxu0 0.0
  %787 = vmatpush.xpose.msra.mxu0 0.0
  %788 = vmatpush.xpose.msra.mxu0 0.0
  %789 = vmatpush.xpose.msra.mxu0 0.0
  %790 = vmatpush.xpose.msra.mxu0 0.0
  %791 = vmatpush.xpose.msra.mxu0 0.0
  %792 = vmatpush.xpose.msra.mxu0 0.0
  %793 = vmatpush.xpose.msra.mxu0 0.0
  %794 = vmatpush.xpose.msra.mxu0 0.0
  %795 = vmatpush.xpose.msra.mxu0 0.0
  %796 = vmatpush.xpose.msra.mxu0 0.0
  %797 = vmatpush.xpose.msra.mxu0 0.0
  %798 = vmatpush.xpose.msra.mxu0 0.0
  %799 = vmatpush.xpose.msra.mxu0 %v27
  %800 = vmatmul.f32.gmra.mxu0 %v783
  %v801 = vpop.f32.mrf.mxu0
  %v802 = vadd.f32 0.0, %v801
  %803 = vdwg.mxu0
  %v804 = vmul.f32 %v802, %v313
  %v806 = vsel %vm315, %v804, 0
  %808 = vmatpush.msra.mxu0 0.0
  %809 = vmatpush.msra.mxu0 0.0
  %810 = vmatpush.msra.mxu0 0.0
  %811 = vmatpush.msra.mxu0 0.0
  %812 = vmatpush.msra.mxu0 0.0
  %813 = vmatpush.msra.mxu0 0.0
  %814 = vmatpush.msra.mxu0 0.0
  %815 = vmatpush.msra.mxu0 0.0
  %816 = vmatpush.msra.mxu0 0.0
  %817 = vmatpush.msra.mxu0 0.0
  %818 = vmatpush.msra.mxu0 0.0
  %819 = vmatpush.msra.mxu0 0.0
  %820 = vmatpush.msra.mxu0 0.0
  %821 = vmatpush.msra.mxu0 0.0
  %822 = vmatpush.msra.mxu0 0.0
  %823 = vmatpush.msra.mxu0 %v27
  %824 = vmatmul.f32.gmra.mxu0 %v806
  %v825 = vpop.f32.mrf.mxu0
  %v826 = vadd.f32 0.0, %v825
  %827 = vdwg.mxu0
  %v828 = vperm.slane %v826, 0
  %v829 = vsub.f32 %v769, %v828
  %v830 = vsub.f32 %v770, %v828
  %v831 = vsub.f32 %v771, %v828
  %v832 = vsub.f32 %v772, %v828
  %v833 = vmul.f32 %v829, %v829
  %v834 = vmul.f32 %v830, %v830
  %v835 = vmul.f32 %v831, %v831
  %v836 = vmul.f32 %v832, %v832
  %v837 = vadd.f32 %v833, %v834
  %v838 = vadd.f32 %v837, %v835
  %v839 = vadd.f32 %v838, %v836
  %v840 = vrot.slane %v839, 4
  %v841 = vadd.f32 %v839, %v840
  %v842 = vrot.slane %v841, 2
  %v843 = vadd.f32 %v841, %v842
  %v844 = vrot.slane %v843, 1
  %v845 = vadd.f32 %v843, %v844
  %846 = vmatpush.xpose.msra.mxu0 0.0
  %847 = vmatpush.xpose.msra.mxu0 0.0
  %848 = vmatpush.xpose.msra.mxu0 0.0
  %849 = vmatpush.xpose.msra.mxu0 0.0
  %850 = vmatpush.xpose.msra.mxu0 0.0
  %851 = vmatpush.xpose.msra.mxu0 0.0
  %852 = vmatpush.xpose.msra.mxu0 0.0
  %853 = vmatpush.xpose.msra.mxu0 0.0
  %854 = vmatpush.xpose.msra.mxu0 0.0
  %855 = vmatpush.xpose.msra.mxu0 0.0
  %856 = vmatpush.xpose.msra.mxu0 0.0
  %857 = vmatpush.xpose.msra.mxu0 0.0
  %858 = vmatpush.xpose.msra.mxu0 0.0
  %859 = vmatpush.xpose.msra.mxu0 0.0
  %860 = vmatpush.xpose.msra.mxu0 0.0
  %861 = vmatpush.xpose.msra.mxu0 %v27
  %862 = vmatmul.f32.gmra.mxu0 %v845
  %v863 = vpop.f32.mrf.mxu0
  %v864 = vadd.f32 0.0, %v863
  %865 = vdwg.mxu0
  %v866 = vmul.f32 %v864, %v313
  %v867 = vadd.f32 %v866, 1e-05
  %v868 = vrsqrt.pop %v867
  %v869 = vmul.f32 %v868, %v867
  %v870 = vmul.f32 %v869, %v868
  %v871 = vmul.f32 0.5, %v870
  %v872 = vsub.f32 1.5, %v871
  %v873 = vmul.f32 %v868, %v872
  %vm874 = vweird.f32 %v867
  %vm875 = vweird.f32 %v868
  %vm876 = vmor %vm874, %vm875
  %v877 = vsel %vm876, %v868, %v873
  %v878 = vmul.f32 %v773, %v877
  %v880 = vsel %vm315, %v878, 0
  %882 = vmatpush.msra.mxu0 0.0
  %883 = vmatpush.msra.mxu0 0.0
  %884 = vmatpush.msra.mxu0 0.0
  %885 = vmatpush.msra.mxu0 0.0
  %886 = vmatpush.msra.mxu0 0.0
  %887 = vmatpush.msra.mxu0 0.0
  %888 = vmatpush.msra.mxu0 0.0
  %889 = vmatpush.msra.mxu0 0.0
  %890 = vmatpush.msra.mxu0 0.0
  %891 = vmatpush.msra.mxu0 0.0
  %892 = vmatpush.msra.mxu0 0.0
  %893 = vmatpush.msra.mxu0 0.0
  %894 = vmatpush.msra.mxu0 0.0
  %895 = vmatpush.msra.mxu0 0.0
  %896 = vmatpush.msra.mxu0 0.0
  %897 = vmatpush.msra.mxu0 %v27
  %898 = vmatmul.f32.gmra.mxu0 %v880
  %v899 = vpop.f32.mrf.mxu0
  %v900 = vadd.f32 0.0, %v899
  %901 = vdwg.mxu0
  %v902 = vperm.slane %v900, 0
  %v903 = vmul.f32 %v829, %v902
  %v904 = vmul.f32 %v830, %v902
  %v905 = vmul.f32 %v831, %v902
  %v906 = vmul.f32 %v832, %v902
  %v907 = vperm.slane %v774, 0
  %v908 = vadd.f32 %v903, %v907
  %v909 = vadd.f32 %v904, %v907
  %v910 = vadd.f32 %v905, %v907
  %v911 = vadd.f32 %v906, %v907
  %v912 = vld [vmem:[%s3] sm:$0xf]
  %v913 = vld [vmem:[%s3 + $0x4] sm:$0xf]
  %v914 = vld [vmem:[%s3 + $0x8] sm:$0xf]
  %v915 = vld [vmem:[%s3 + $0xc] sm:$0xf]
  %v916 = vld [vmem:[%s3 + $0x10] sm:$0xf]
  %v917 = vld [vmem:[%s3 + $0x14] sm:$0xf]
  %v918 = vld [vmem:[%s3 + $0x18] sm:$0xf]
  %v919 = vld [vmem:[%s3 + $0x1c] sm:$0xf]
  %v920 = vunpack.c.l.b16 %v28
  %v921 = vunpack.c.l.b16 %v29
  %v922 = vunpack.c.l.b16 %v30
  %v923 = vunpack.c.l.b16 %v31
  %v924 = vpack.c.b16 %v921, %v920
  %v925 = vpack.c.b16 %v923, %v922
  %v934 = vunpack.c.l.b16 %v912
  %v935 = vunpack.c.l.b16 %v913
  %v936 = vunpack.c.l.b16 %v914
  %v937 = vunpack.c.l.b16 %v915
  %v938 = vunpack.c.l.b16 %v916
  %v939 = vunpack.c.l.b16 %v917
  %v940 = vunpack.c.l.b16 %v918
  %v941 = vunpack.c.l.b16 %v919
  %v942 = vpack.c.b16 %v935, %v934
  %v943 = vpack.c.b16 %v937, %v936
  %v944 = vpack.c.b16 %v939, %v938
  %v945 = vpack.c.b16 %v941, %v940
  %v951 = vsel %vm131, %v924, 0
  %v954 = vsel %vm131, %v925, 0
  %956 = vmatpush.bf16.msra.mxu0 0
  %957 = vmatpush.bf16.msra.mxu0 0
  %958 = vmatpush.bf16.msra.mxu0 0
  %959 = vmatpush.bf16.msra.mxu0 0
  %960 = vmatpush.bf16.msra.mxu0 %v945
  %961 = vmatpush.bf16.msra.mxu0 %v944
  %962 = vmatpush.bf16.msra.mxu0 %v943
  %963 = vmatpush.bf16.msra.mxu0 %v942
  %964 = vmatmul.bf16.gmra.mxu0 %v951
  %v965 = vpop.f32.mrf.mxu0
  %v966 = vadd.f32 0.0, %v965
  %v967 = vpop.f32.mrf.mxu0
  %v968 = vadd.f32 0.0, %v967
  %969 = vmatmul.bf16.gmra.mxu0 %v954
  %v970 = vpop.f32.mrf.mxu0
  %v971 = vadd.f32 0.0, %v970
  %v972 = vpop.f32.mrf.mxu0
  %v973 = vadd.f32 0.0, %v972
  %974 = vdwg.mxu0
  %v975 = vld [vmem:[%s5 + $0x2] sm:$0x1]
  %v976 = vld [vmem:[%s6 + $0x2] sm:$0x1]
  %v977 = vadd.f32 %v966, %v968
  %v978 = vadd.f32 %v977, %v971
  %v979 = vadd.f32 %v978, %v973
  %v980 = vrot.slane %v979, 4
  %v981 = vadd.f32 %v979, %v980
  %v982 = vrot.slane %v981, 2
  %v983 = vadd.f32 %v981, %v982
  %v984 = vrot.slane %v983, 1
  %v985 = vadd.f32 %v983, %v984
  %986 = vmatpush.xpose.msra.mxu0 0.0
  %987 = vmatpush.xpose.msra.mxu0 0.0
  %988 = vmatpush.xpose.msra.mxu0 0.0
  %989 = vmatpush.xpose.msra.mxu0 0.0
  %990 = vmatpush.xpose.msra.mxu0 0.0
  %991 = vmatpush.xpose.msra.mxu0 0.0
  %992 = vmatpush.xpose.msra.mxu0 0.0
  %993 = vmatpush.xpose.msra.mxu0 0.0
  %994 = vmatpush.xpose.msra.mxu0 0.0
  %995 = vmatpush.xpose.msra.mxu0 0.0
  %996 = vmatpush.xpose.msra.mxu0 0.0
  %997 = vmatpush.xpose.msra.mxu0 0.0
  %998 = vmatpush.xpose.msra.mxu0 0.0
  %999 = vmatpush.xpose.msra.mxu0 0.0
  %1000 = vmatpush.xpose.msra.mxu0 0.0
  %1001 = vmatpush.xpose.msra.mxu0 %v27
  %1002 = vmatmul.f32.gmra.mxu0 %v985
  %v1003 = vpop.f32.mrf.mxu0
  %v1004 = vadd.f32 0.0, %v1003
  %1005 = vdwg.mxu0
  %v1006 = vmul.f32 %v1004, %v313
  %v1008 = vsel %vm315, %v1006, 0
  %1010 = vmatpush.msra.mxu0 0.0
  %1011 = vmatpush.msra.mxu0 0.0
  %1012 = vmatpush.msra.mxu0 0.0
  %1013 = vmatpush.msra.mxu0 0.0
  %1014 = vmatpush.msra.mxu0 0.0
  %1015 = vmatpush.msra.mxu0 0.0
  %1016 = vmatpush.msra.mxu0 0.0
  %1017 = vmatpush.msra.mxu0 0.0
  %1018 = vmatpush.msra.mxu0 0.0
  %1019 = vmatpush.msra.mxu0 0.0
  %1020 = vmatpush.msra.mxu0 0.0
  %1021 = vmatpush.msra.mxu0 0.0
  %1022 = vmatpush.msra.mxu0 0.0
  %1023 = vmatpush.msra.mxu0 0.0
  %1024 = vmatpush.msra.mxu0 0.0
  %1025 = vmatpush.msra.mxu0 %v27
  %1026 = vmatmul.f32.gmra.mxu0 %v1008
  %v1027 = vpop.f32.mrf.mxu0
  %v1028 = vadd.f32 0.0, %v1027
  %1029 = vdwg.mxu0
  %v1030 = vperm.slane %v1028, 0
  %v1031 = vsub.f32 %v966, %v1030
  %v1032 = vsub.f32 %v968, %v1030
  %v1033 = vsub.f32 %v971, %v1030
  %v1034 = vsub.f32 %v973, %v1030
  %v1035 = vmul.f32 %v1031, %v1031
  %v1036 = vmul.f32 %v1032, %v1032
  %v1037 = vmul.f32 %v1033, %v1033
  %v1038 = vmul.f32 %v1034, %v1034
  %v1039 = vadd.f32 %v1035, %v1036
  %v1040 = vadd.f32 %v1039, %v1037
  %v1041 = vadd.f32 %v1040, %v1038
  %v1042 = vrot.slane %v1041, 4
  %v1043 = vadd.f32 %v1041, %v1042
  %v1044 = vrot.slane %v1043, 2
  %v1045 = vadd.f32 %v1043, %v1044
  %v1046 = vrot.slane %v1045, 1
  %v1047 = vadd.f32 %v1045, %v1046
  %1048 = vmatpush.xpose.msra.mxu0 0.0
  %1049 = vmatpush.xpose.msra.mxu0 0.0
  %1050 = vmatpush.xpose.msra.mxu0 0.0
  %1051 = vmatpush.xpose.msra.mxu0 0.0
  %1052 = vmatpush.xpose.msra.mxu0 0.0
  %1053 = vmatpush.xpose.msra.mxu0 0.0
  %1054 = vmatpush.xpose.msra.mxu0 0.0
  %1055 = vmatpush.xpose.msra.mxu0 0.0
  %1056 = vmatpush.xpose.msra.mxu0 0.0
  %1057 = vmatpush.xpose.msra.mxu0 0.0
  %1058 = vmatpush.xpose.msra.mxu0 0.0
  %1059 = vmatpush.xpose.msra.mxu0 0.0
  %1060 = vmatpush.xpose.msra.mxu0 0.0
  %1061 = vmatpush.xpose.msra.mxu0 0.0
  %1062 = vmatpush.xpose.msra.mxu0 0.0
  %1063 = vmatpush.xpose.msra.mxu0 %v27
  %1064 = vmatmul.f32.gmra.mxu0 %v1047
  %v1065 = vpop.f32.mrf.mxu0
  %v1066 = vadd.f32 0.0, %v1065
  %1067 = vdwg.mxu0
  %v1068 = vmul.f32 %v1066, %v313
  %v1069 = vadd.f32 %v1068, 1e-05
  %v1070 = vrsqrt.pop %v1069
  %v1071 = vmul.f32 %v1070, %v1069
  %v1072 = vmul.f32 %v1071, %v1070
  %v1073 = vmul.f32 0.5, %v1072
  %v1074 = vsub.f32 1.5, %v1073
  %v1075 = vmul.f32 %v1070, %v1074
  %vm1076 = vweird.f32 %v1069
  %vm1077 = vweird.f32 %v1070
  %vm1078 = vmor %vm1076, %vm1077
  %v1079 = vsel %vm1078, %v1070, %v1075
  %v1080 = vmul.f32 %v975, %v1079
  %v1082 = vsel %vm315, %v1080, 0
  %1084 = vmatpush.msra.mxu0 0.0
  %1085 = vmatpush.msra.mxu0 0.0
  %1086 = vmatpush.msra.mxu0 0.0
  %1087 = vmatpush.msra.mxu0 0.0
  %1088 = vmatpush.msra.mxu0 0.0
  %1089 = vmatpush.msra.mxu0 0.0
  %1090 = vmatpush.msra.mxu0 0.0
  %1091 = vmatpush.msra.mxu0 0.0
  %1092 = vmatpush.msra.mxu0 0.0
  %1093 = vmatpush.msra.mxu0 0.0
  %1094 = vmatpush.msra.mxu0 0.0
  %1095 = vmatpush.msra.mxu0 0.0
  %1096 = vmatpush.msra.mxu0 0.0
  %1097 = vmatpush.msra.mxu0 0.0
  %1098 = vmatpush.msra.mxu0 0.0
  %1099 = vmatpush.msra.mxu0 %v27
  %1100 = vmatmul.f32.gmra.mxu0 %v1082
  %v1101 = vpop.f32.mrf.mxu0
  %v1102 = vadd.f32 0.0, %v1101
  %1103 = vdwg.mxu0
  %v1104 = vperm.slane %v1102, 0
  %v1105 = vmul.f32 %v1031, %v1104
  %v1106 = vmul.f32 %v1032, %v1104
  %v1107 = vmul.f32 %v1033, %v1104
  %v1108 = vmul.f32 %v1034, %v1104
  %v1109 = vperm.slane %v976, 0
  %v1110 = vadd.f32 %v1105, %v1109
  %v1111 = vadd.f32 %v1106, %v1109
  %v1112 = vadd.f32 %v1107, %v1109
  %v1113 = vadd.f32 %v1108, %v1109
  %v1114 = vadd.f32 %v908, %v1110
  %v1115 = vadd.f32 %v909, %v1111
  %v1116 = vadd.f32 %v910, %v1112
  %v1117 = vadd.f32 %v911, %v1113
  %v1118 = vmax.f32 %v1114, 0.0
  %v1119 = vmax.f32 %v1115, 0.0
  %v1120 = vmax.f32 %v1116, 0.0
  %v1121 = vmax.f32 %v1117, 0.0
  %1122 = vst [vmem:[%s7] sm:$0xff] %v1118
  %1123 = vst [vmem:[%s7 + $0x8] sm:$0xff] %v1119
  %1124 = vst [vmem:[%s7 + $0x10] sm:$0xff] %v1120
  %1125 = vst [vmem:[%s7 + $0x18] sm:$0xff] %v1121
  // Predicated region
  $region30: #{resnet_forward.1} parent=0 // pred_check
    _
  $region31: #{resnet_forward.1} parent=0 // pred_check_branch
    %1127 = sbr.rel (0) target = $region33
  $region32: #{resnet_forward.1} parent=0 // pred_region
    _
  $region33: #{resnet_forward.1} parent=0 // pred_fallthru
    _
  // Predicated region
  $region34: #{resnet_forward.1} parent=0 // pred_check
    _
  $region35: #{resnet_forward.1} parent=0 // pred_check_branch
    %1129 = sbr.rel (0) target = $region37
  $region36: #{resnet_forward.1} parent=0 // pred_region
    _
  $region37: #{resnet_forward.1} parent=0 // pred_fallthru
    _

</llo_original>
